<compile_context>
chip_gen: v7x
topology: tpu7x:2x2x1
jax: 0.10.0
libtpu: 0.0.40
codegen_flags: <defaults>
</compile_context>

<pallas_src>
import functools

import jax
import jax.numpy as jnp
import numpy as np
from jax import lax
from jax.experimental import pallas as pl
from jax.experimental.pallas import tpu as pltpu


def _residual_block_kernel(x_ref, w1_ref, b1_ref, w2_ref, b2_ref, out_ref, *, H):
    """One row-block per grid step, merged (W*C) lane layout.

    x_ref  : (rows, W*C)    f32 input rows (whole images; residual read from here)
    w1_ref : (3, W*C, W*C)  bf16 conv1 block-banded weights (one matrix per dy)
    b1_ref : (1, W*C)       f32 conv1 bias tiled along W
    w2_ref : (3, W*C, W*C)  bf16 conv2 block-banded weights
    b2_ref : (1, W*C)       f32 conv2 bias tiled along W
    out_ref: (rows, W*C)    f32 output rows
    """
    R, WC = x_ref.shape
    x = x_ref[...].astype(jnp.float32)

    # Row-within-image index; (R, 1) masks broadcast along lanes in jnp.where.
    hidx = lax.broadcasted_iota(jnp.int32, (R, 1), 0) % H
    not_top = hidx > 0          # row h-1 exists within the image
    not_bot = hidx < (H - 1)    # row h+1 exists within the image

    def conv3x3(src, w_ref, bias_ref):
        # Row r of `up` holds src[r-1] (zero at image top); `down` holds src[r+1].
        up = jnp.where(not_top, pltpu.roll(src, 1, 0), 0.0)
        down = jnp.where(not_bot, pltpu.roll(src, R - 1, 0), 0.0)
        # bf16 operands feed the MXU; accumulation stays f32.
        acc = jnp.dot(up.astype(jnp.bfloat16), w_ref[0],
                      preferred_element_type=jnp.float32)
        acc = acc + jnp.dot(src.astype(jnp.bfloat16), w_ref[1],
                            preferred_element_type=jnp.float32)
        acc = acc + jnp.dot(down.astype(jnp.bfloat16), w_ref[2],
                            preferred_element_type=jnp.float32)
        return acc + bias_ref[...]

    act = jnp.maximum(conv3x3(x, w1_ref, b1_ref), 0.0)     # conv1 + ReLU
    y = conv3x3(act, w2_ref, b2_ref)                        # conv2
    out_ref[...] = (y + x).astype(out_ref.dtype)            # + identity


def _pack_banded_weights(w_hwio, W):
    """(3, 3, Cin, Cout) HWIO -> (3, W*Cin, W*Cout) block-banded matrices.

    B[dy, wi*C + ci, wo*C + co] = w[dy, kw, ci, co] where wi = wo + kw - 1,
    so one matmul against B[dy] applies all three horizontal taps of kernel
    row dy with the W border handled implicitly by the zero blocks.
    """
    kh, kw, Cin, Cout = w_hwio.shape
    # Placement tensor P[kw, wi, wo] = 1 iff wi == wo + kw - 1 (built once, numpy).
    wi = np.arange(W)[None, :, None]
    wo = np.arange(W)[None, None, :]
    kk = np.arange(3)[:, None, None]
    P = (wi == wo + kk - 1).astype(np.float32)
    B = jnp.einsum("kio,dkcf->dicof", jnp.asarray(P), w_hwio)
    return B.reshape(3, W * Cin, W * Cout)


def _choose_rows_block(N, H, target_rows=1024):
    """Pick a row block: whole images, sublane-aligned, ~target rows, >=2 steps."""
    total = N * H
    cands = [d for d in range(1, N + 1)
             if N % d == 0 and ((d * H) % 8 == 0 or d * H == total)]
    fit = [d for d in cands if d * H <= target_rows]
    d = max(fit) if fit else min(cands)
    if d == N and N > 1:                 # keep >= 2 grid steps (pipelining / v7x)
        smaller = [c for c in cands if c < N]
        if smaller:
            d = max(smaller)
    return d * H


def _const_spec(shape):
    # Constant-index blocks (weights / bias): single pipeline buffer is enough.
    return pl.BlockSpec(shape, lambda *_: (0,) * len(shape),
                        pipeline_mode=pl.Buffered(1))


def residual_block(x_nhwc, w1, b1, w2, b2, *, rows_block=None):
    """x_nhwc: (N, H, W, C) f32; w: (3, 3, C, C) HWIO; b: (C,)."""
    N, H, W, C = x_nhwc.shape
    WC = W * C
    total = N * H

    x_m = x_nhwc.reshape(total, WC)                         # lane-dense merged rows
    B1 = _pack_banded_weights(w1, W).astype(jnp.bfloat16)   # bf16 for the MXU
    B2 = _pack_banded_weights(w2, W).astype(jnp.bfloat16)
    b1m = jnp.tile(b1, W).reshape(1, WC).astype(jnp.float32)
    b2m = jnp.tile(b2, W).reshape(1, WC).astype(jnp.float32)

    rb = _choose_rows_block(N, H) if rows_block is None else rows_block
    assert total % rb == 0 and rb % H == 0, "row block must hold whole images"
    grid = (total // rb,)

    out_m = pl.pallas_call(
        functools.partial(_residual_block_kernel, H=H),
        out_shape=jax.ShapeDtypeStruct((total, WC), x_nhwc.dtype),
        grid_spec=pltpu.PrefetchScalarGridSpec(
            num_scalar_prefetch=0,
            grid=grid,
            in_specs=[
                pl.BlockSpec((rb, WC), lambda i: (i, 0)),
                _const_spec((3, WC, WC)),
                _const_spec((1, WC)),
                _const_spec((3, WC, WC)),
                _const_spec((1, WC)),
            ],
            out_specs=pl.BlockSpec((rb, WC), lambda i: (i, 0)),
        ),
        compiler_params=pltpu.CompilerParams(
            dimension_semantics=("parallel",),      # row blocks are independent
            vmem_limit_bytes=32 * 1024 * 1024),     # safe on v5e/v6e/v7x
    )(x_m, B1, b1m, B2, b2m)
    return out_m.reshape(N, H, W, C)


def residual_block_nchw(x_nchw, w1_oihw, b1, w2_oihw, b2):
    """Same layout/signature as the PyTorch module: x (N,C,H,W), w (Cout,Cin,3,3)."""
    x_nhwc = jnp.transpose(x_nchw, (0, 2, 3, 1))
    w1 = jnp.transpose(w1_oihw, (2, 3, 1, 0))      # OIHW -> HWIO
    w2 = jnp.transpose(w2_oihw, (2, 3, 1, 0))
    out = residual_block(x_nhwc, w1, b1, w2, b2)
    return jnp.transpose(out, (0, 3, 1, 2))


def _reference_nhwc(x_nhwc, w1, b1, w2, b2):
    """Pure-JAX f32 reference (same semantics as the PyTorch module)."""
    dn = lax.conv_dimension_numbers(x_nhwc.shape, w1.shape,
                                    ('NHWC', 'HWIO', 'NHWC'))
    y = lax.conv_general_dilated(x_nhwc, w1, (1, 1), 'SAME',
                                 dimension_numbers=dn) + b1
    y = jnp.maximum(y, 0.0)
    y = lax.conv_general_dilated(y, w2, (1, 1), 'SAME',
                                 dimension_numbers=dn) + b2
    return y + x_nhwc


if __name__ == "__main__":
    # Module default: in_channels=32; small deterministic test shapes (NCHW).
    N, C, H, W = 2, 32, 8, 8
    key = jax.random.PRNGKey(0)
    kx, kw1, kb1, kw2, kb2 = jax.random.split(key, 5)

    x = jax.random.normal(kx, (N, C, H, W), dtype=jnp.float32)
    fan_in = C * 3 * 3
    w1 = jax.random.normal(kw1, (C, C, 3, 3), dtype=jnp.float32) / jnp.sqrt(fan_in)
    b1 = jax.random.normal(kb1, (C,), dtype=jnp.float32) * 0.01
    w2 = jax.random.normal(kw2, (C, C, 3, 3), dtype=jnp.float32) / jnp.sqrt(fan_in)
    b2 = jax.random.normal(kb2, (C,), dtype=jnp.float32) * 0.01

    out = residual_block_nchw(x, w1, b1, w2, b2)
    out = jax.block_until_ready(out)
    assert out.shape == (N, C, H, W)

    ref = _reference_nhwc(jnp.transpose(x, (0, 2, 3, 1)),
                          jnp.transpose(w1, (2, 3, 1, 0)), b1,
                          jnp.transpose(w2, (2, 3, 1, 0)), b2)
    ref = jnp.transpose(ref, (0, 3, 1, 2))
    # bf16 MXU operands with f32 accumulation: allow ~1e-2-level deviation.
    assert jnp.allclose(out, ref, atol=5e-2, rtol=5e-2), "mismatch vs reference"

    print("KERNEL_OK")
</pallas_src>

<mosaic_0001>
module attributes {stable_mosaic.version = 11 : i64} {
  func.func @_residual_block_kernel(%arg0: i32, %arg1: memref<8x256xf32, #tpu.memory_space<vmem>>, %arg2: memref<3x256x256xbf16, #tpu.memory_space<vmem>>, %arg3: memref<1x256xf32, #tpu.memory_space<vmem>>, %arg4: memref<3x256x256xbf16, #tpu.memory_space<vmem>>, %arg5: memref<1x256xf32, #tpu.memory_space<vmem>>, %arg6: memref<8x256xf32, #tpu.memory_space<vmem>>) attributes {dimension_semantics = [#tpu.dimension_semantics<parallel>], iteration_bounds = array<i64: 2>, scalar_prefetch = 0 : i64, scratch_operands = 0 : i64, tpu.core_type = #tpu.core_type<tc>, window_params = [{transform_indices = @transform_0, window_bounds = array<i64: 8, 256>}, {pipeline_mode = #tpu.pipeline_mode<synchronous>, transform_indices = @transform_1, window_bounds = array<i64: 3, 256, 256>}, {pipeline_mode = #tpu.pipeline_mode<synchronous>, transform_indices = @transform_2, window_bounds = array<i64: 1, 256>}, {pipeline_mode = #tpu.pipeline_mode<synchronous>, transform_indices = @transform_3, window_bounds = array<i64: 3, 256, 256>}, {pipeline_mode = #tpu.pipeline_mode<synchronous>, transform_indices = @transform_4, window_bounds = array<i64: 1, 256>}, {transform_indices = @transform_5, window_bounds = array<i64: 8, 256>}]} {
    %c0 = arith.constant 0 : index
    %c0_0 = arith.constant 0 : index
    %0 = vector.load %arg1[%c0, %c0_0] : memref<8x256xf32, #tpu.memory_space<vmem>>, vector<8x256xf32>
    %1 = tpu.iota {dimensions = array<i32: 0>} : vector<8x1xi32>
    %c8_i32 = arith.constant 8 : i32
    %c0_i32 = arith.constant 0 : i32
    %2 = arith.cmpi eq, %c8_i32, %c0_i32 : i32
    %c1_i32 = arith.constant 1 : i32
    %3 = arith.select %2, %c1_i32, %c8_i32 : i32
    %4 = vector.broadcast %3 : i32 to vector<8x1xi32>
    %5 = arith.remsi %1, %4 : vector<8x1xi32>
    %c0_i32_1 = arith.constant 0 : i32
    %6 = vector.broadcast %c0_i32_1 : i32 to vector<8x1xi32>
    %7 = arith.cmpi ne, %5, %6 : vector<8x1xi32>
    %c0_i32_2 = arith.constant 0 : i32
    %8 = vector.broadcast %c0_i32_2 : i32 to vector<8x1xi32>
    %9 = arith.cmpi slt, %5, %8 : vector<8x1xi32>
    %c0_i32_3 = arith.constant 0 : i32
    %10 = arith.cmpi slt, %3, %c0_i32_3 : i32
    %11 = vector.broadcast %10 : i1 to vector<8x1xi1>
    %12 = vector.broadcast %11 : vector<8x1xi1> to vector<8x1xi1>
    %13 = arith.xori %9, %12 : vector<8x1xi1>
    %14 = arith.andi %13, %7 : vector<8x1xi1>
    %15 = vector.broadcast %3 : i32 to vector<8x1xi32>
    %16 = arith.addi %5, %15 : vector<8x1xi32>
    %17 = arith.select %14, %16, %5 : vector<8x1xi1>, vector<8x1xi32>
    %c0_i32_4 = arith.constant 0 : i32
    %18 = vector.broadcast %c0_i32_4 : i32 to vector<8x1xi32>
    %19 = arith.cmpi sgt, %17, %18 : vector<8x1xi32>
    %c7_i32 = arith.constant 7 : i32
    %20 = vector.broadcast %c7_i32 : i32 to vector<8x1xi32>
    %21 = arith.cmpi slt, %17, %20 : vector<8x1xi32>
    %c1_i32_5 = arith.constant 1 : i32
    %22 = tpu.dynamic_rotate %0 by %c1_i32_5 dim 0 : vector<8x256xf32>, i32 -> vector<8x256xf32>
    %cst = arith.constant 0.000000e+00 : f32
    %23 = vector.shape_cast %19 : vector<8x1xi1> to vector<8x1xi1>
    %24 = vector.broadcast %23 : vector<8x1xi1> to vector<8x256xi1>
    %25 = vector.broadcast %cst : f32 to vector<8x256xf32>
    %26 = arith.select %24, %22, %25 : vector<8x256xi1>, vector<8x256xf32>
    %c7_i32_6 = arith.constant 7 : i32
    %27 = tpu.dynamic_rotate %0 by %c7_i32_6 dim 0 : vector<8x256xf32>, i32 -> vector<8x256xf32>
    %cst_7 = arith.constant 0.000000e+00 : f32
    %28 = vector.shape_cast %21 : vector<8x1xi1> to vector<8x1xi1>
    %29 = vector.broadcast %28 : vector<8x1xi1> to vector<8x256xi1>
    %30 = vector.broadcast %cst_7 : f32 to vector<8x256xf32>
    %31 = arith.select %29, %27, %30 : vector<8x256xi1>, vector<8x256xf32>
    %32 = arith.truncf %26 : vector<8x256xf32> to vector<8x256xbf16>
    %c0_8 = arith.constant 0 : index
    %c0_9 = arith.constant 0 : index
    %c0_10 = arith.constant 0 : index
    %33 = vector.load %arg2[%c0_8, %c0_9, %c0_10] : memref<3x256x256xbf16, #tpu.memory_space<vmem>>, vector<1x256x256xbf16>
    %34 = vector.shape_cast %33 : vector<1x256x256xbf16> to vector<256x256xbf16>
    %cst_11 = arith.constant dense<0.000000e+00> : vector<8x256xf32>
    %35 = tpu.matmul %32, %34, %cst_11 {dimension_numbers = #tpu.dot_dimension_numbers<[1], [0], [0], [1], [0, 0, 1, 1], [], []>} : vector<8x256xbf16>, vector<256x256xbf16>, vector<8x256xf32> -> vector<8x256xf32>
    %36 = arith.truncf %0 : vector<8x256xf32> to vector<8x256xbf16>
    %c1 = arith.constant 1 : index
    %c0_12 = arith.constant 0 : index
    %c0_13 = arith.constant 0 : index
    %37 = vector.load %arg2[%c1, %c0_12, %c0_13] : memref<3x256x256xbf16, #tpu.memory_space<vmem>>, vector<1x256x256xbf16>
    %38 = vector.shape_cast %37 : vector<1x256x256xbf16> to vector<256x256xbf16>
    %cst_14 = arith.constant dense<0.000000e+00> : vector<8x256xf32>
    %39 = tpu.matmul %36, %38, %cst_14 {dimension_numbers = #tpu.dot_dimension_numbers<[1], [0], [0], [1], [0, 0, 1, 1], [], []>} : vector<8x256xbf16>, vector<256x256xbf16>, vector<8x256xf32> -> vector<8x256xf32>
    %40 = arith.addf %35, %39 : vector<8x256xf32>
    %41 = arith.truncf %31 : vector<8x256xf32> to vector<8x256xbf16>
    %c2 = arith.constant 2 : index
    %c0_15 = arith.constant 0 : index
    %c0_16 = arith.constant 0 : index
    %42 = vector.load %arg2[%c2, %c0_15, %c0_16] : memref<3x256x256xbf16, #tpu.memory_space<vmem>>, vector<1x256x256xbf16>
    %43 = vector.shape_cast %42 : vector<1x256x256xbf16> to vector<256x256xbf16>
    %cst_17 = arith.constant dense<0.000000e+00> : vector<8x256xf32>
    %44 = tpu.matmul %41, %43, %cst_17 {dimension_numbers = #tpu.dot_dimension_numbers<[1], [0], [0], [1], [0, 0, 1, 1], [], []>} : vector<8x256xbf16>, vector<256x256xbf16>, vector<8x256xf32> -> vector<8x256xf32>
    %45 = arith.addf %40, %44 : vector<8x256xf32>
    %c0_18 = arith.constant 0 : index
    %c0_19 = arith.constant 0 : index
    %46 = vector.load %arg3[%c0_18, %c0_19] : memref<1x256xf32, #tpu.memory_space<vmem>>, vector<1x256xf32>
    %47 = vector.broadcast %46 : vector<1x256xf32> to vector<8x256xf32>
    %48 = arith.addf %45, %47 : vector<8x256xf32>
    %cst_20 = arith.constant 0.000000e+00 : f32
    %49 = vector.broadcast %cst_20 : f32 to vector<8x256xf32>
    %50 = arith.maximumf %48, %49 : vector<8x256xf32>
    %c1_i32_21 = arith.constant 1 : i32
    %51 = tpu.dynamic_rotate %50 by %c1_i32_21 dim 0 : vector<8x256xf32>, i32 -> vector<8x256xf32>
    %cst_22 = arith.constant 0.000000e+00 : f32
    %52 = vector.shape_cast %19 : vector<8x1xi1> to vector<8x1xi1>
    %53 = vector.broadcast %52 : vector<8x1xi1> to vector<8x256xi1>
    %54 = vector.broadcast %cst_22 : f32 to vector<8x256xf32>
    %55 = arith.select %53, %51, %54 : vector<8x256xi1>, vector<8x256xf32>
    %c7_i32_23 = arith.constant 7 : i32
    %56 = tpu.dynamic_rotate %50 by %c7_i32_23 dim 0 : vector<8x256xf32>, i32 -> vector<8x256xf32>
    %cst_24 = arith.constant 0.000000e+00 : f32
    %57 = vector.shape_cast %21 : vector<8x1xi1> to vector<8x1xi1>
    %58 = vector.broadcast %57 : vector<8x1xi1> to vector<8x256xi1>
    %59 = vector.broadcast %cst_24 : f32 to vector<8x256xf32>
    %60 = arith.select %58, %56, %59 : vector<8x256xi1>, vector<8x256xf32>
    %61 = arith.truncf %55 : vector<8x256xf32> to vector<8x256xbf16>
    %c0_25 = arith.constant 0 : index
    %c0_26 = arith.constant 0 : index
    %c0_27 = arith.constant 0 : index
    %62 = vector.load %arg4[%c0_25, %c0_26, %c0_27] : memref<3x256x256xbf16, #tpu.memory_space<vmem>>, vector<1x256x256xbf16>
    %63 = vector.shape_cast %62 : vector<1x256x256xbf16> to vector<256x256xbf16>
    %cst_28 = arith.constant dense<0.000000e+00> : vector<8x256xf32>
    %64 = tpu.matmul %61, %63, %cst_28 {dimension_numbers = #tpu.dot_dimension_numbers<[1], [0], [0], [1], [0, 0, 1, 1], [], []>} : vector<8x256xbf16>, vector<256x256xbf16>, vector<8x256xf32> -> vector<8x256xf32>
    %65 = arith.truncf %50 : vector<8x256xf32> to vector<8x256xbf16>
    %c1_29 = arith.constant 1 : index
    %c0_30 = arith.constant 0 : index
    %c0_31 = arith.constant 0 : index
    %66 = vector.load %arg4[%c1_29, %c0_30, %c0_31] : memref<3x256x256xbf16, #tpu.memory_space<vmem>>, vector<1x256x256xbf16>
    %67 = vector.shape_cast %66 : vector<1x256x256xbf16> to vector<256x256xbf16>
    %cst_32 = arith.constant dense<0.000000e+00> : vector<8x256xf32>
    %68 = tpu.matmul %65, %67, %cst_32 {dimension_numbers = #tpu.dot_dimension_numbers<[1], [0], [0], [1], [0, 0, 1, 1], [], []>} : vector<8x256xbf16>, vector<256x256xbf16>, vector<8x256xf32> -> vector<8x256xf32>
    %69 = arith.addf %64, %68 : vector<8x256xf32>
    %70 = arith.truncf %60 : vector<8x256xf32> to vector<8x256xbf16>
    %c2_33 = arith.constant 2 : index
    %c0_34 = arith.constant 0 : index
    %c0_35 = arith.constant 0 : index
    %71 = vector.load %arg4[%c2_33, %c0_34, %c0_35] : memref<3x256x256xbf16, #tpu.memory_space<vmem>>, vector<1x256x256xbf16>
    %72 = vector.shape_cast %71 : vector<1x256x256xbf16> to vector<256x256xbf16>
    %cst_36 = arith.constant dense<0.000000e+00> : vector<8x256xf32>
    %73 = tpu.matmul %70, %72, %cst_36 {dimension_numbers = #tpu.dot_dimension_numbers<[1], [0], [0], [1], [0, 0, 1, 1], [], []>} : vector<8x256xbf16>, vector<256x256xbf16>, vector<8x256xf32> -> vector<8x256xf32>
    %74 = arith.addf %69, %73 : vector<8x256xf32>
    %c0_37 = arith.constant 0 : index
    %c0_38 = arith.constant 0 : index
    %75 = vector.load %arg5[%c0_37, %c0_38] : memref<1x256xf32, #tpu.memory_space<vmem>>, vector<1x256xf32>
    %76 = vector.broadcast %75 : vector<1x256xf32> to vector<8x256xf32>
    %77 = arith.addf %74, %76 : vector<8x256xf32>
    %78 = arith.addf %77, %0 : vector<8x256xf32>
    %c0_39 = arith.constant 0 : index
    %c0_40 = arith.constant 0 : index
    %79 = vector.load %arg6[%c0_39, %c0_40] : memref<8x256xf32, #tpu.memory_space<vmem>>, vector<8x256xf32>
    tpu.vector_store %arg6[%c0_39, %c0_40], %78 {strides = array<i32>} : memref<8x256xf32, #tpu.memory_space<vmem>>, vector<8x256xf32>,
    return
  }
  func.func @transform_0(%arg0: i32) -> (i32, i32) {
    %c0_i32 = arith.constant 0 : i32
    %c0_i32_0 = arith.constant 0 : i32
    return %arg0, %c0_i32 : i32, i32
  }
  func.func @transform_1(%arg0: i32) -> (i32, i32, i32) {
    %c0_i32 = arith.constant 0 : i32
    %c0_i32_0 = arith.constant 0 : i32
    %c0_i32_1 = arith.constant 0 : i32
    %c0_i32_2 = arith.constant 0 : i32
    return %c0_i32, %c0_i32_0, %c0_i32_1 : i32, i32, i32
  }
  func.func @transform_2(%arg0: i32) -> (i32, i32) {
    %c0_i32 = arith.constant 0 : i32
    %c0_i32_0 = arith.constant 0 : i32
    %c0_i32_1 = arith.constant 0 : i32
    return %c0_i32, %c0_i32_0 : i32, i32
  }
  func.func @transform_3(%arg0: i32) -> (i32, i32, i32) {
    %c0_i32 = arith.constant 0 : i32
    %c0_i32_0 = arith.constant 0 : i32
    %c0_i32_1 = arith.constant 0 : i32
    %c0_i32_2 = arith.constant 0 : i32
    return %c0_i32, %c0_i32_0, %c0_i32_1 : i32, i32, i32
  }
  func.func @transform_4(%arg0: i32) -> (i32, i32) {
    %c0_i32 = arith.constant 0 : i32
    %c0_i32_0 = arith.constant 0 : i32
    %c0_i32_1 = arith.constant 0 : i32
    return %c0_i32, %c0_i32_0 : i32, i32
  }
  func.func @transform_5(%arg0: i32) -> (i32, i32) {
    %c0_i32 = arith.constant 0 : i32
    %c0_i32_0 = arith.constant 0 : i32
    return %arg0, %c0_i32 : i32, i32
  }
}

</mosaic_0001>

<llo_original>
// kernel: tpu_custom_call.1
$region0: #{tpu_custom_call.1}
  #allocation0 [shape = 'u32[]', space=smem, size = 0x4, offset = 0x4, fixed_abs, tag = 'smem constant byte address 0x4 - core index']
  #allocation1 [shape = 'u32[144,128]{1,0:T(1,128)}', space=vmem, size = 0x12000, scoped, tag = 'internal scratch']
  %s0 = inlined_call_operand.hbm [shape: f32[16,256], index: 0, kind: input, shape index: {}]
  %s1 = inlined_call_operand.hbm [shape: bf16[3,256,256], index: 1, kind: input, shape index: {}]
  %s2 = inlined_call_operand.vmem [shape: f32[1,256], index: 2, kind: input, shape index: {}]
  %s3 = inlined_call_operand.hbm [shape: bf16[3,256,256], index: 3, kind: input, shape index: {}]
  %s4 = inlined_call_operand.vmem [shape: f32[1,256], index: 4, kind: input, shape index: {}]
  %s5 = inlined_call_operand.hbm [shape: f32[16,256], index: 5, kind: output, shape index: {}]
  %s6 = sld [smem:[#allocation0]]
  $region65: #{tpu_custom_call.1} parent=0
    _
  %s8 = ssub.s32 1, %s6
  %s9 = scalar_select 0, %s8, %s6
  $region1: #{tpu_custom_call.1} parent=0
    #allocation2 [shape = 'u8[16384]{0}', space=vmem, size = 0x4000, scoped, tag = 'input window, operand 0']
    #allocation3 [shape = 's32[2]{0}', space=sflag, size = 0x8, scoped, tag = 'scoped memory for tpu_custom_call.1']
    #allocation4 [shape = 's32[2]{0}', space=sflag, size = 0x8, scoped, tag = 'scoped memory for tpu_custom_call.1']
    #allocation5 [shape = 'u8[393216]{0}', space=vmem, size = 0x60000, scoped, tag = 'input window, operand 1, single buffered']
    #allocation6 [shape = 's32[1]{0}', space=sflag, size = 0x4, scoped, tag = 'scoped memory for tpu_custom_call.1']
    #allocation7 [shape = 'u8[393216]{0}', space=vmem, size = 0x60000, scoped, tag = 'input window, operand 3, single buffered']
    #allocation8 [shape = 'u8[16384]{0}', space=vmem, size = 0x4000, scoped, tag = 'output window, operand 0']
    %10 = vsyncpa [#allocation3], 0
    %s11 = scalar_lea.sflag [#allocation3], 1
    %12 = vsyncpa %s11, 0
    %13 = vsyncpa [#allocation6], 0
    %14 = vsyncpa [#allocation4], 0
    %s15 = scalar_lea.sflag [#allocation4], 1
    %16 = vsyncpa %s15, 0
    loop: start=0, step=1, limit=4
    $region2: #{tpu_custom_call.1} parent=1 // loop_pre_header
      _
    $region3: #{tpu_custom_call.1} parent=1 // loop_header
      %s18 = sphi 0, %s22
      %p19 = scmp.ge.s32.totalorder %s18, 4
      %s28 = sphi 0, %s30
      %s31 = sphi 0, %s28
      %s32 = sphi 0, %s31
      %s48 = sphi 0, %s32
      %s52 = sphi 0, %s52
      %s54 = sphi 0, %s52
      %s55 = sphi 0, %s54
      %s69 = sphi 0, %s55
      %s73 = sphi 0, %s73
      %s75 = sphi 0, %s73
      %s76 = sphi 0, %s75
      %s90 = sphi 0, %s76
      %s94 = sphi 0, %s94
      %s96 = sphi 0, %s94
      %s97 = sphi 0, %s96
      %s111 = sphi 0, %s97
      %s115 = sphi 0, %s115
      %s117 = sphi 0, %s115
      %s118 = sphi 0, %s117
      %s132 = sphi 0, %s118
      %s138 = sphi 0, %s140
      %s141 = sphi 0, %s138
      %s142 = sphi 0, %s141
      %s158 = sphi 0, %s142
    $region4: #{tpu_custom_call.1} parent=1 // loop_header_branch
      %21 = sbr.rel (%p19) target = $region8
    $region5: #{tpu_custom_call.1} parent=1 // loop_body
      %s23 = ssub.s32 %s18, 1
      %s24 = ssub.s32 %s18, 2
      %s25 = sadd.s32 %s18, 1
      %s26 = ssub.s32 %s18, %s25
      %p27 = scmp.eq.s32.totalorder %s26, 0
      %s29 = sadd.s32 %s28, 1
      %s30 = scalar_select %p27, %s28, %s29
      %p33 = pneg %p27
      %p34 = scmp.eq.s32.totalorder %s18, 1
      %p35 = por %p33, %p34
      %p36 = scmp.ne.s32.totalorder %s28, %s31
      %p37 = scmp.eq.s32.totalorder %s18, 0
      %p38 = por %p36, %p37
      %p39 = scmp.ne.s32.totalorder %s28, %s31
      %p40 = scmp.eq.s32.totalorder %s23, 1
      %p41 = por %p39, %p40
      %p42 = scmp.ne.s32.totalorder %s31, %s32
      %p43 = scmp.eq.s32.totalorder %s23, 0
      %p44 = por %p42, %p43
      %p45 = scmp.ne.s32.totalorder %s31, %s32
      %p46 = scmp.eq.s32.totalorder %s24, 1
      %p47 = por %p45, %p46
      %p49 = scmp.ne.s32.totalorder %s32, %s48
      %p50 = scmp.eq.s32.totalorder %s24, 0
      %p51 = por %p49, %p50
      %s53 = sadd.s32 %s52, 1
      %p56 = scmp.eq.s32.totalorder %s18, 1
      %p57 = scmp.ne.s32.totalorder %s52, %s54
      %p58 = scmp.eq.s32.totalorder %s18, 0
      %p59 = por %p57, %p58
      %p60 = scmp.ne.s32.totalorder %s52, %s54
      %p61 = scmp.eq.s32.totalorder %s23, 1
      %p62 = por %p60, %p61
      %p63 = scmp.ne.s32.totalorder %s54, %s55
      %p64 = scmp.eq.s32.totalorder %s23, 0
      %p65 = por %p63, %p64
      %p66 = scmp.ne.s32.totalorder %s54, %s55
      %p67 = scmp.eq.s32.totalorder %s24, 1
      %p68 = por %p66, %p67
      %p70 = scmp.ne.s32.totalorder %s55, %s69
      %p71 = scmp.eq.s32.totalorder %s24, 0
      %p72 = por %p70, %p71
      %s74 = sadd.s32 %s73, 1
      %p77 = scmp.eq.s32.totalorder %s18, 1
      %p78 = scmp.ne.s32.totalorder %s73, %s75
      %p79 = scmp.eq.s32.totalorder %s18, 0
      %p80 = por %p78, %p79
      %p81 = scmp.ne.s32.totalorder %s73, %s75
      %p82 = scmp.eq.s32.totalorder %s23, 1
      %p83 = por %p81, %p82
      %p84 = scmp.ne.s32.totalorder %s75, %s76
      %p85 = scmp.eq.s32.totalorder %s23, 0
      %p86 = por %p84, %p85
      %p87 = scmp.ne.s32.totalorder %s75, %s76
      %p88 = scmp.eq.s32.totalorder %s24, 1
      %p89 = por %p87, %p88
      %p91 = scmp.ne.s32.totalorder %s76, %s90
      %p92 = scmp.eq.s32.totalorder %s24, 0
      %p93 = por %p91, %p92
      %s95 = sadd.s32 %s94, 1
      %p98 = scmp.eq.s32.totalorder %s18, 1
      %p99 = scmp.ne.s32.totalorder %s94, %s96
      %p100 = scmp.eq.s32.totalorder %s18, 0
      %p101 = por %p99, %p100
      %p102 = scmp.ne.s32.totalorder %s94, %s96
      %p103 = scmp.eq.s32.totalorder %s23, 1
      %p104 = por %p102, %p103
      %p105 = scmp.ne.s32.totalorder %s96, %s97
      %p106 = scmp.eq.s32.totalorder %s23, 0
      %p107 = por %p105, %p106
      %p108 = scmp.ne.s32.totalorder %s96, %s97
      %p109 = scmp.eq.s32.totalorder %s24, 1
      %p110 = por %p108, %p109
      %p112 = scmp.ne.s32.totalorder %s97, %s111
      %p113 = scmp.eq.s32.totalorder %s24, 0
      %p114 = por %p112, %p113
      %s116 = sadd.s32 %s115, 1
      %p119 = scmp.eq.s32.totalorder %s18, 1
      %p120 = scmp.ne.s32.totalorder %s115, %s117
      %p121 = scmp.eq.s32.totalorder %s18, 0
      %p122 = por %p120, %p121
      %p123 = scmp.ne.s32.totalorder %s115, %s117
      %p124 = scmp.eq.s32.totalorder %s23, 1
      %p125 = por %p123, %p124
      %p126 = scmp.ne.s32.totalorder %s117, %s118
      %p127 = scmp.eq.s32.totalorder %s23, 0
      %p128 = por %p126, %p127
      %p129 = scmp.ne.s32.totalorder %s117, %s118
      %p130 = scmp.eq.s32.totalorder %s24, 1
      %p131 = por %p129, %p130
      %p133 = scmp.ne.s32.totalorder %s118, %s132
      %p134 = scmp.eq.s32.totalorder %s24, 0
      %p135 = por %p133, %p134
      %s136 = ssub.s32 %s18, %s25
      %p137 = scmp.eq.s32.totalorder %s136, 0
      %s139 = sadd.s32 %s138, 1
      %s140 = scalar_select %p137, %s138, %s139
      %p143 = pneg %p137
      %p144 = scmp.eq.s32.totalorder %s18, 1
      %p145 = por %p143, %p144
      %p146 = scmp.ne.s32.totalorder %s138, %s141
      %p147 = scmp.eq.s32.totalorder %s18, 0
      %p148 = por %p146, %p147
      %p149 = scmp.ne.s32.totalorder %s138, %s141
      %p150 = scmp.eq.s32.totalorder %s23, 1
      %p151 = por %p149, %p150
      %p152 = scmp.ne.s32.totalorder %s141, %s142
      %p153 = scmp.eq.s32.totalorder %s23, 0
      %p154 = por %p152, %p153
      %p155 = scmp.ne.s32.totalorder %s141, %s142
      %p156 = scmp.eq.s32.totalorder %s24, 1
      %p157 = por %p155, %p156
      %p159 = scmp.ne.s32.totalorder %s142, %s158
      %p160 = scmp.eq.s32.totalorder %s24, 0
      %p161 = por %p159, %p160
      %p162 = scmp.le.s32.totalorder 1, %s18
      %p163 = scmp.lt.s32.totalorder %s18, 3
      %p164 = pnand %p162, %p163
      %p165 = pneg %p164
      // Predicated region
      $region9: #{tpu_custom_call.1} parent=5 // pred_check
        _
      $region10: #{tpu_custom_call.1} parent=5 // pred_check_branch
        %167 = sbr.rel (%p164) target = $region12
      $region11: #{tpu_custom_call.1} parent=5 // pred_region
        %s168 = ssub.s32 %s18, 1
        // Predicated region
        $region13: #{tpu_custom_call.1} parent=11 // pred_check
          %p169 = pneg %p65
        $region14: #{tpu_custom_call.1} parent=11 // pred_check_branch
          %171 = sbr.rel (%p169) target = $region16
        $region15: #{tpu_custom_call.1} parent=11 // pred_region
          %s173 = ssub.s32 12288, 12288
          %174 = vsyncadd [#allocation6], %s173
          %s175 = sshll.u32 [#allocation5], 4
          %s176 = int_to_ptr.vmem [resolvable:$true] %s175
          %181 = dma.hbm_to_vmem [thread:$0]  %s1, 12288, %s176, [#allocation6], 128, 128, 8
        $region16: #{tpu_custom_call.1} parent=11 // pred_fallthru
          _
        // Predicated region
        $region17: #{tpu_custom_call.1} parent=11 // pred_check
          %p182 = pneg %p86
        $region18: #{tpu_custom_call.1} parent=11 // pred_check_branch
          %184 = sbr.rel (%p182) target = $region20
        $region19: #{tpu_custom_call.1} parent=11 // pred_region
          _
        $region20: #{tpu_custom_call.1} parent=11 // pred_fallthru
          _
        // Predicated region
        $region21: #{tpu_custom_call.1} parent=11 // pred_check
          %p185 = pneg %p107
        $region22: #{tpu_custom_call.1} parent=11 // pred_check_branch
          %187 = sbr.rel (%p185) target = $region24
        $region23: #{tpu_custom_call.1} parent=11 // pred_region
          %s189 = ssub.s32 12288, 12288
          %190 = vsyncadd [#allocation6], %s189
          %s191 = sshll.u32 [#allocation7], 4
          %s192 = int_to_ptr.vmem [resolvable:$true] %s191
          %197 = dma.hbm_to_vmem [thread:$0]  %s3, 12288, %s192, [#allocation6], 128, 128, 8
        $region24: #{tpu_custom_call.1} parent=11 // pred_fallthru
          _
        // Predicated region
        $region25: #{tpu_custom_call.1} parent=11 // pred_check
          %p198 = pneg %p128
        $region26: #{tpu_custom_call.1} parent=11 // pred_check_branch
          %200 = sbr.rel (%p198) target = $region28
        $region27: #{tpu_custom_call.1} parent=11 // pred_region
          _
        $region28: #{tpu_custom_call.1} parent=11 // pred_fallthru
          _
      $region12: #{tpu_custom_call.1} parent=5 // pred_fallthru
        _
      %p201 = scmp.lt.s32.totalorder %s18, 2
      // Predicated region
      $region29: #{tpu_custom_call.1} parent=5 // pred_check
        %p202 = pneg %p201
      $region30: #{tpu_custom_call.1} parent=5 // pred_check_branch
        %204 = sbr.rel (%p202) target = $region32
      $region31: #{tpu_custom_call.1} parent=5 // pred_region
        // Predicated region
        $region33: #{tpu_custom_call.1} parent=31 // pred_check
          %p205 = pneg %p38
        $region34: #{tpu_custom_call.1} parent=31 // pred_check_branch
          %207 = sbr.rel (%p205) target = $region36
        $region35: #{tpu_custom_call.1} parent=31 // pred_region
          %s208 = sand.u32 %s28, 1
          %s209 = scalar_lea.sflag [#allocation3], %s208
          %s210 = sand.u32 %s28, 1
          %s211 = smul.addr %s210, 16
          %s212 = scalar_lea.vmem [#allocation2], %s211
          %s214 = ssub.s32 256, 256
          %215 = vsyncadd %s209, %s214
          %s216 = smul.addr %s18, 2
          %s217 = smul.addr %s216, 128
          %s218 = scalar_lea.hbm %s0, %s217
          %s220 = sshll.u32 %s212, 4
          %s221 = int_to_ptr.vmem [resolvable:$true] %s220
          %223 = dma.hbm_to_vmem [thread:$0]  %s218, 256, %s221, %s209
        $region36: #{tpu_custom_call.1} parent=31 // pred_fallthru
          _
      $region32: #{tpu_custom_call.1} parent=5 // pred_fallthru
        _
      %p224 = scmp.le.s32.totalorder 1, %s18
      %p225 = scmp.lt.s32.totalorder %s18, 3
      %p226 = pnand %p224, %p225
      %p227 = pneg %p226
      // Predicated region
      $region37: #{tpu_custom_call.1} parent=5 // pred_check
        _
      $region38: #{tpu_custom_call.1} parent=5 // pred_check_branch
        %229 = sbr.rel (%p226) target = $region40
      $region39: #{tpu_custom_call.1} parent=5 // pred_region
        %s230 = ssub.s32 %s18, 1
        %s231 = sand.u32 %s31, 1
        %s232 = scalar_lea.sflag [#allocation3], %s231
        %s233 = sand.u32 %s31, 1
        %s234 = smul.addr %s233, 16
        %s235 = scalar_lea.vmem [#allocation2], %s234
        // Predicated region
        $region41: #{tpu_custom_call.1} parent=39 // pred_check
          %p236 = pneg %p44
        $region42: #{tpu_custom_call.1} parent=39 // pred_check_branch
          %238 = sbr.rel (%p236) target = $region44
        $region43: #{tpu_custom_call.1} parent=39 // pred_region
          %239 = dma.done %s232, 256
        $region44: #{tpu_custom_call.1} parent=39 // pred_fallthru
          _
        // Predicated region
        $region45: #{tpu_custom_call.1} parent=39 // pred_check
          %p240 = pneg %p65
        $region46: #{tpu_custom_call.1} parent=39 // pred_check_branch
          %242 = sbr.rel (%p240) target = $region48
        $region47: #{tpu_custom_call.1} parent=39 // pred_region
          %243 = dma.done [#allocation6], 12288
        $region48: #{tpu_custom_call.1} parent=39 // pred_fallthru
          _
        // Predicated region
        $region49: #{tpu_custom_call.1} parent=39 // pred_check
          %p244 = pneg %p107
        $region50: #{tpu_custom_call.1} parent=39 // pred_check_branch
          %246 = sbr.rel (%p244) target = $region52
        $region51: #{tpu_custom_call.1} parent=39 // pred_region
          %247 = dma.done [#allocation6], 12288
        $region52: #{tpu_custom_call.1} parent=39 // pred_fallthru
          _
        %s248 = sand.u32 %s31, 1
        %s249 = scalar_lea.sflag [#allocation3], %s248
        %s250 = sand.u32 %s31, 1
        %s251 = smul.addr %s250, 16
        %s252 = scalar_lea.vmem [#allocation2], %s251
        %p253 = pneg %p44
        %p254 = pneg %p41
        %p255 = pneg %p65
        %p256 = pneg %p62
        %p257 = pneg %p86
        %p258 = pneg %p83
        %p259 = pneg %p107
        %p260 = pneg %p104
        %p261 = pneg %p128
        %p262 = pneg %p125
        %p263 = pneg %p154
        %p264 = pneg %p151
        %s265 = sand.u32 %s141, 1
        %s266 = scalar_lea.sflag [#allocation4], %s265
        %s267 = sand.u32 %s141, 1
        %s268 = smul.addr %s267, 16
        %s269 = scalar_lea.vmem [#allocation8], %s268
        %v270 = vld [vmem:[%s235] sm:$0xff]
        %v271 = vld [vmem:[%s235 + $0x8] sm:$0xff]
        %v272 = vlaneseq
        %v273 = vshrl.u32 %v272, 7
        %vm274 = vcmp.lt.s32.totalorder %v273, 0
        %v275 = vsub.s32 0, %v273
        %v276 = vsel %vm274, %v275, %v273
        %v277 = vshrl.u32 %v276, 3
        %v278 = vand.u32 %v276, 7
        %v279 = vsub.s32 0, %v278
        %v280 = vsel %vm274, %v279, %v278
        %vm281 = vcmp.ne.s32.totalorder %v280, 0
        %vm282 = vcmp.lt.s32.totalorder %v280, 0
        %vm283 = vmand %vm282, %vm281
        %v284 = vadd.s32 %v280, 8
        %v285 = vsel %vm283, %v284, %v280
        %vm286 = vcmp.gt.s32.totalorder %v285, 0
        %vm287 = vcmp.lt.s32.totalorder %v285, 7
        %v288 = vrot.slane %v270, 7
        %v289 = vrot.slane %v271, 7
        %v290 = vsel %vm286, 1, 0
        %vm291 = vcmp.eq.s32.totalorder %v290, 1
        %v292 = vsel %vm291, %v288, 0.0
        %v293 = vsel %vm291, %v289, 0.0
        %v294 = vrot.slane %v270, 1
        %v295 = vrot.slane %v271, 1
        %v296 = vsel %vm287, 1, 0
        %vm297 = vcmp.eq.s32.totalorder %v296, 1
        %v298 = vsel %vm297, %v294, 0.0
        %v299 = vsel %vm297, %v295, 0.0
        %v300 = vpack.c.bf16 %v292, %v292
        %v301 = vpack.c.bf16 %v293, %v293
        %v302 = vld [vmem:[#allocation5] sm:$0xff]
        %v303 = vld [vmem:[#allocation5 + $0x8] sm:$0xff]
        %v304 = vld [vmem:[#allocation5 + $0x10] sm:$0xff]
        %v305 = vld [vmem:[#allocation5 + $0x18] sm:$0xff]
        %v306 = vld [vmem:[#allocation5 + $0x20] sm:$0xff]
        %v307 = vld [vmem:[#allocation5 + $0x28] sm:$0xff]
        %v308 = vld [vmem:[#allocation5 + $0x30] sm:$0xff]
        %v309 = vld [vmem:[#allocation5 + $0x38] sm:$0xff]
        %v310 = vld [vmem:[#allocation5 + $0x40] sm:$0xff]
        %v311 = vld [vmem:[#allocation5 + $0x48] sm:$0xff]
        %v312 = vld [vmem:[#allocation5 + $0x50] sm:$0xff]
        %v313 = vld [vmem:[#allocation5 + $0x58] sm:$0xff]
        %v314 = vld [vmem:[#allocation5 + $0x60] sm:$0xff]
        %v315 = vld [vmem:[#allocation5 + $0x68] sm:$0xff]
        %v316 = vld [vmem:[#allocation5 + $0x70] sm:$0xff]
        %v317 = vld [vmem:[#allocation5 + $0x78] sm:$0xff]
        %v318 = vld [vmem:[#allocation5 + $0x80] sm:$0xff]
        %v319 = vld [vmem:[#allocation5 + $0x88] sm:$0xff]
        %v320 = vld [vmem:[#allocation5 + $0x90] sm:$0xff]
        %v321 = vld [vmem:[#allocation5 + $0x98] sm:$0xff]
        %v322 = vld [vmem:[#allocation5 + $0xa0] sm:$0xff]
        %v323 = vld [vmem:[#allocation5 + $0xa8] sm:$0xff]
        %v324 = vld [vmem:[#allocation5 + $0xb0] sm:$0xff]
        %v325 = vld [vmem:[#allocation5 + $0xb8] sm:$0xff]
        %v326 = vld [vmem:[#allocation5 + $0xc0] sm:$0xff]
        %v327 = vld [vmem:[#allocation5 + $0xc8] sm:$0xff]
        %v328 = vld [vmem:[#allocation5 + $0xd0] sm:$0xff]
        %v329 = vld [vmem:[#allocation5 + $0xd8] sm:$0xff]
        %v330 = vld [vmem:[#allocation5 + $0xe0] sm:$0xff]
        %v331 = vld [vmem:[#allocation5 + $0xe8] sm:$0xff]
        %v332 = vld [vmem:[#allocation5 + $0xf0] sm:$0xff]
        %v333 = vld [vmem:[#allocation5 + $0xf8] sm:$0xff]
        %v334 = vpack.c.bf16 %v270, %v270
        %v335 = vpack.c.bf16 %v271, %v271
        %s336 = scalar_lea.vmem [#allocation5], 256
        %v337 = vld [vmem:[%s336] sm:$0xff]
        %v338 = vld [vmem:[%s336 + $0x8] sm:$0xff]
        %v339 = vld [vmem:[%s336 + $0x10] sm:$0xff]
        %v340 = vld [vmem:[%s336 + $0x18] sm:$0xff]
        %v341 = vld [vmem:[%s336 + $0x20] sm:$0xff]
        %v342 = vld [vmem:[%s336 + $0x28] sm:$0xff]
        %v343 = vld [vmem:[%s336 + $0x30] sm:$0xff]
        %v344 = vld [vmem:[%s336 + $0x38] sm:$0xff]
        %v345 = vld [vmem:[%s336 + $0x40] sm:$0xff]
        %v346 = vld [vmem:[%s336 + $0x48] sm:$0xff]
        %v347 = vld [vmem:[%s336 + $0x50] sm:$0xff]
        %v348 = vld [vmem:[%s336 + $0x58] sm:$0xff]
        %v349 = vld [vmem:[%s336 + $0x60] sm:$0xff]
        %v350 = vld [vmem:[%s336 + $0x68] sm:$0xff]
        %v351 = vld [vmem:[%s336 + $0x70] sm:$0xff]
        %v352 = vld [vmem:[%s336 + $0x78] sm:$0xff]
        %v353 = vld [vmem:[%s336 + $0x80] sm:$0xff]
        %v354 = vld [vmem:[%s336 + $0x88] sm:$0xff]
        %v355 = vld [vmem:[%s336 + $0x90] sm:$0xff]
        %v356 = vld [vmem:[%s336 + $0x98] sm:$0xff]
        %v357 = vld [vmem:[%s336 + $0xa0] sm:$0xff]
        %v358 = vld [vmem:[%s336 + $0xa8] sm:$0xff]
        %v359 = vld [vmem:[%s336 + $0xb0] sm:$0xff]
        %v360 = vld [vmem:[%s336 + $0xb8] sm:$0xff]
        %v361 = vld [vmem:[%s336 + $0xc0] sm:$0xff]
        %v362 = vld [vmem:[%s336 + $0xc8] sm:$0xff]
        %v363 = vld [vmem:[%s336 + $0xd0] sm:$0xff]
        %v364 = vld [vmem:[%s336 + $0xd8] sm:$0xff]
        %v365 = vld [vmem:[%s336 + $0xe0] sm:$0xff]
        %v366 = vld [vmem:[%s336 + $0xe8] sm:$0xff]
        %v367 = vld [vmem:[%s336 + $0xf0] sm:$0xff]
        %v368 = vld [vmem:[%s336 + $0xf8] sm:$0xff]
        %v401 = vunpack.c.l.b16 %v337
        %v402 = vunpack.c.h.b16 %v337
        %v403 = vunpack.c.l.b16 %v338
        %v404 = vunpack.c.h.b16 %v338
        %v405 = vunpack.c.l.b16 %v339
        %v406 = vunpack.c.h.b16 %v339
        %v407 = vunpack.c.l.b16 %v340
        %v408 = vunpack.c.h.b16 %v340
        %v409 = vunpack.c.l.b16 %v341
        %v410 = vunpack.c.h.b16 %v341
        %v411 = vunpack.c.l.b16 %v342
        %v412 = vunpack.c.h.b16 %v342
        %v413 = vunpack.c.l.b16 %v343
        %v414 = vunpack.c.h.b16 %v343
        %v415 = vunpack.c.l.b16 %v344
        %v416 = vunpack.c.h.b16 %v344
        %v417 = vunpack.c.l.b16 %v345
        %v418 = vunpack.c.h.b16 %v345
        %v419 = vunpack.c.l.b16 %v346
        %v420 = vunpack.c.h.b16 %v346
        %v421 = vunpack.c.l.b16 %v347
        %v422 = vunpack.c.h.b16 %v347
        %v423 = vunpack.c.l.b16 %v348
        %v424 = vunpack.c.h.b16 %v348
        %v425 = vunpack.c.l.b16 %v349
        %v426 = vunpack.c.h.b16 %v349
        %v427 = vunpack.c.l.b16 %v350
        %v428 = vunpack.c.h.b16 %v350
        %v429 = vunpack.c.l.b16 %v351
        %v430 = vunpack.c.h.b16 %v351
        %v431 = vunpack.c.l.b16 %v352
        %v432 = vunpack.c.h.b16 %v352
        %v433 = vunpack.c.l.b16 %v353
        %v434 = vunpack.c.h.b16 %v353
        %v435 = vunpack.c.l.b16 %v354
        %v436 = vunpack.c.h.b16 %v354
        %v437 = vunpack.c.l.b16 %v355
        %v438 = vunpack.c.h.b16 %v355
        %v439 = vunpack.c.l.b16 %v356
        %v440 = vunpack.c.h.b16 %v356
        %v441 = vunpack.c.l.b16 %v357
        %v442 = vunpack.c.h.b16 %v357
        %v443 = vunpack.c.l.b16 %v358
        %v444 = vunpack.c.h.b16 %v358
        %v445 = vunpack.c.l.b16 %v359
        %v446 = vunpack.c.h.b16 %v359
        %v447 = vunpack.c.l.b16 %v360
        %v448 = vunpack.c.h.b16 %v360
        %v449 = vunpack.c.l.b16 %v361
        %v450 = vunpack.c.h.b16 %v361
        %v451 = vunpack.c.l.b16 %v362
        %v452 = vunpack.c.h.b16 %v362
        %v453 = vunpack.c.l.b16 %v363
        %v454 = vunpack.c.h.b16 %v363
        %v455 = vunpack.c.l.b16 %v364
        %v456 = vunpack.c.h.b16 %v364
        %v457 = vunpack.c.l.b16 %v365
        %v458 = vunpack.c.h.b16 %v365
        %v459 = vunpack.c.l.b16 %v366
        %v460 = vunpack.c.h.b16 %v366
        %v461 = vunpack.c.l.b16 %v367
        %v462 = vunpack.c.h.b16 %v367
        %v463 = vunpack.c.l.b16 %v368
        %v464 = vunpack.c.h.b16 %v368
        %v465 = vpack.c.b16 %v403, %v401
        %v466 = vpack.c.b16 %v404, %v402
        %v467 = vpack.c.b16 %v407, %v405
        %v468 = vpack.c.b16 %v408, %v406
        %v469 = vpack.c.b16 %v411, %v409
        %v470 = vpack.c.b16 %v412, %v410
        %v471 = vpack.c.b16 %v415, %v413
        %v472 = vpack.c.b16 %v416, %v414
        %v473 = vpack.c.b16 %v419, %v417
        %v474 = vpack.c.b16 %v420, %v418
        %v475 = vpack.c.b16 %v423, %v421
        %v476 = vpack.c.b16 %v424, %v422
        %v477 = vpack.c.b16 %v427, %v425
        %v478 = vpack.c.b16 %v428, %v426
        %v479 = vpack.c.b16 %v431, %v429
        %v480 = vpack.c.b16 %v432, %v430
        %v481 = vpack.c.b16 %v435, %v433
        %v482 = vpack.c.b16 %v436, %v434
        %v483 = vpack.c.b16 %v439, %v437
        %v484 = vpack.c.b16 %v440, %v438
        %v485 = vpack.c.b16 %v443, %v441
        %v486 = vpack.c.b16 %v444, %v442
        %v487 = vpack.c.b16 %v447, %v445
        %v488 = vpack.c.b16 %v448, %v446
        %v489 = vpack.c.b16 %v451, %v449
        %v490 = vpack.c.b16 %v452, %v450
        %v491 = vpack.c.b16 %v455, %v453
        %v492 = vpack.c.b16 %v456, %v454
        %v493 = vpack.c.b16 %v459, %v457
        %v494 = vpack.c.b16 %v460, %v458
        %v495 = vpack.c.b16 %v463, %v461
        %v496 = vpack.c.b16 %v464, %v462
        %529 = vmatprep.subr.bf16.mxu0 %v466
        %530 = vmatpush1.bf16.msra.mxu0 %v465
        %531 = vmatprep.subr.bf16.mxu0 %v468
        %532 = vmatpush1.bf16.msra.mxu0 %v467
        %533 = vmatprep.subr.bf16.mxu0 %v470
        %534 = vmatpush1.bf16.msra.mxu0 %v469
        %535 = vmatprep.subr.bf16.mxu0 %v472
        %536 = vmatpush1.bf16.msra.mxu0 %v471
        %537 = vmatprep.subr.bf16.mxu0 %v474
        %538 = vmatpush1.bf16.msra.mxu0 %v473
        %539 = vmatprep.subr.bf16.mxu0 %v476
        %540 = vmatpush1.bf16.msra.mxu0 %v475
        %541 = vmatprep.subr.bf16.mxu0 %v478
        %542 = vmatpush1.bf16.msra.mxu0 %v477
        %543 = vmatprep.subr.bf16.mxu0 %v480
        %544 = vmatpush1.bf16.msra.mxu0 %v479
        %545 = vmatprep.subr.bf16.mxu0 %v482
        %546 = vmatpush1.bf16.msra.mxu0 %v481
        %547 = vmatprep.subr.bf16.mxu0 %v484
        %548 = vmatpush1.bf16.msra.mxu0 %v483
        %549 = vmatprep.subr.bf16.mxu0 %v486
        %550 = vmatpush1.bf16.msra.mxu0 %v485
        %551 = vmatprep.subr.bf16.mxu0 %v488
        %552 = vmatpush1.bf16.msra.mxu0 %v487
        %553 = vmatprep.subr.bf16.mxu0 %v490
        %554 = vmatpush1.bf16.msra.mxu0 %v489
        %555 = vmatprep.subr.bf16.mxu0 %v492
        %556 = vmatpush1.bf16.msra.mxu0 %v491
        %557 = vmatprep.subr.bf16.mxu0 %v494
        %558 = vmatpush1.bf16.msra.mxu0 %v493
        %559 = vmatprep.subr.bf16.mxu0 %v496
        %560 = vmatpush1.bf16.msra.mxu0 %v495
        %561 = vmatprep.mubr.bf16.mxu0 %v335
        %562 = vmatmul.mubr.bf16.gmra.mrb[0].mxu0 %v334
        %v563 = vpop.f32.mrb[0].mxu0
        %v564 = vadd.f32 0.0, %v563
        %v565 = vpop.f32.mrb[0].mxu0
        %v566 = vadd.f32 0.0, %v565
        %v567 = vpop.f32.mrb[0].mxu0
        %v568 = vpop.f32.mrb[0].mxu0
        %569 = vdwg.mxu0
        %v602 = vunpack.c.l.b16 %v302
        %v603 = vunpack.c.h.b16 %v302
        %v604 = vunpack.c.l.b16 %v303
        %v605 = vunpack.c.h.b16 %v303
        %v606 = vunpack.c.l.b16 %v304
        %v607 = vunpack.c.h.b16 %v304
        %v608 = vunpack.c.l.b16 %v305
        %v609 = vunpack.c.h.b16 %v305
        %v610 = vunpack.c.l.b16 %v306
        %v611 = vunpack.c.h.b16 %v306
        %v612 = vunpack.c.l.b16 %v307
        %v613 = vunpack.c.h.b16 %v307
        %v614 = vunpack.c.l.b16 %v308
        %v615 = vunpack.c.h.b16 %v308
        %v616 = vunpack.c.l.b16 %v309
        %v617 = vunpack.c.h.b16 %v309
        %v618 = vunpack.c.l.b16 %v310
        %v619 = vunpack.c.h.b16 %v310
        %v620 = vunpack.c.l.b16 %v311
        %v621 = vunpack.c.h.b16 %v311
        %v622 = vunpack.c.l.b16 %v312
        %v623 = vunpack.c.h.b16 %v312
        %v624 = vunpack.c.l.b16 %v313
        %v625 = vunpack.c.h.b16 %v313
        %v626 = vunpack.c.l.b16 %v314
        %v627 = vunpack.c.h.b16 %v314
        %v628 = vunpack.c.l.b16 %v315
        %v629 = vunpack.c.h.b16 %v315
        %v630 = vunpack.c.l.b16 %v316
        %v631 = vunpack.c.h.b16 %v316
        %v632 = vunpack.c.l.b16 %v317
        %v633 = vunpack.c.h.b16 %v317
        %v634 = vunpack.c.l.b16 %v318
        %v635 = vunpack.c.h.b16 %v318
        %v636 = vunpack.c.l.b16 %v319
        %v637 = vunpack.c.h.b16 %v319
        %v638 = vunpack.c.l.b16 %v320
        %v639 = vunpack.c.h.b16 %v320
        %v640 = vunpack.c.l.b16 %v321
        %v641 = vunpack.c.h.b16 %v321
        %v642 = vunpack.c.l.b16 %v322
        %v643 = vunpack.c.h.b16 %v322
        %v644 = vunpack.c.l.b16 %v323
        %v645 = vunpack.c.h.b16 %v323
        %v646 = vunpack.c.l.b16 %v324
        %v647 = vunpack.c.h.b16 %v324
        %v648 = vunpack.c.l.b16 %v325
        %v649 = vunpack.c.h.b16 %v325
        %v650 = vunpack.c.l.b16 %v326
        %v651 = vunpack.c.h.b16 %v326
        %v652 = vunpack.c.l.b16 %v327
        %v653 = vunpack.c.h.b16 %v327
        %v654 = vunpack.c.l.b16 %v328
        %v655 = vunpack.c.h.b16 %v328
        %v656 = vunpack.c.l.b16 %v329
        %v657 = vunpack.c.h.b16 %v329
        %v658 = vunpack.c.l.b16 %v330
        %v659 = vunpack.c.h.b16 %v330
        %v660 = vunpack.c.l.b16 %v331
        %v661 = vunpack.c.h.b16 %v331
        %v662 = vunpack.c.l.b16 %v332
        %v663 = vunpack.c.h.b16 %v332
        %v664 = vunpack.c.l.b16 %v333
        %v665 = vunpack.c.h.b16 %v333
        %v666 = vpack.c.b16 %v604, %v602
        %v667 = vpack.c.b16 %v605, %v603
        %v668 = vpack.c.b16 %v608, %v606
        %v669 = vpack.c.b16 %v609, %v607
        %v670 = vpack.c.b16 %v612, %v610
        %v671 = vpack.c.b16 %v613, %v611
        %v672 = vpack.c.b16 %v616, %v614
        %v673 = vpack.c.b16 %v617, %v615
        %v674 = vpack.c.b16 %v620, %v618
        %v675 = vpack.c.b16 %v621, %v619
        %v676 = vpack.c.b16 %v624, %v622
        %v677 = vpack.c.b16 %v625, %v623
        %v678 = vpack.c.b16 %v628, %v626
        %v679 = vpack.c.b16 %v629, %v627
        %v680 = vpack.c.b16 %v632, %v630
        %v681 = vpack.c.b16 %v633, %v631
        %v682 = vpack.c.b16 %v636, %v634
        %v683 = vpack.c.b16 %v637, %v635
        %v684 = vpack.c.b16 %v640, %v638
        %v685 = vpack.c.b16 %v641, %v639
        %v686 = vpack.c.b16 %v644, %v642
        %v687 = vpack.c.b16 %v645, %v643
        %v688 = vpack.c.b16 %v648, %v646
        %v689 = vpack.c.b16 %v649, %v647
        %v690 = vpack.c.b16 %v652, %v650
        %v691 = vpack.c.b16 %v653, %v651
        %v692 = vpack.c.b16 %v656, %v654
        %v693 = vpack.c.b16 %v657, %v655
        %v694 = vpack.c.b16 %v660, %v658
        %v695 = vpack.c.b16 %v661, %v659
        %v696 = vpack.c.b16 %v664, %v662
        %v697 = vpack.c.b16 %v665, %v663
        %730 = vmatprep.subr.bf16.mxu0 %v667
        %731 = vmatpush1.bf16.msra.mxu0 %v666
        %732 = vmatprep.subr.bf16.mxu0 %v669
        %733 = vmatpush1.bf16.msra.mxu0 %v668
        %734 = vmatprep.subr.bf16.mxu0 %v671
        %735 = vmatpush1.bf16.msra.mxu0 %v670
        %736 = vmatprep.subr.bf16.mxu0 %v673
        %737 = vmatpush1.bf16.msra.mxu0 %v672
        %738 = vmatprep.subr.bf16.mxu0 %v675
        %739 = vmatpush1.bf16.msra.mxu0 %v674
        %740 = vmatprep.subr.bf16.mxu0 %v677
        %741 = vmatpush1.bf16.msra.mxu0 %v676
        %742 = vmatprep.subr.bf16.mxu0 %v679
        %743 = vmatpush1.bf16.msra.mxu0 %v678
        %744 = vmatprep.subr.bf16.mxu0 %v681
        %745 = vmatpush1.bf16.msra.mxu0 %v680
        %746 = vmatprep.subr.bf16.mxu0 %v683
        %747 = vmatpush1.bf16.msra.mxu0 %v682
        %748 = vmatprep.subr.bf16.mxu0 %v685
        %749 = vmatpush1.bf16.msra.mxu0 %v684
        %750 = vmatprep.subr.bf16.mxu0 %v687
        %751 = vmatpush1.bf16.msra.mxu0 %v686
        %752 = vmatprep.subr.bf16.mxu0 %v689
        %753 = vmatpush1.bf16.msra.mxu0 %v688
        %754 = vmatprep.subr.bf16.mxu0 %v691
        %755 = vmatpush1.bf16.msra.mxu0 %v690
        %756 = vmatprep.subr.bf16.mxu0 %v693
        %757 = vmatpush1.bf16.msra.mxu0 %v692
        %758 = vmatprep.subr.bf16.mxu0 %v695
        %759 = vmatpush1.bf16.msra.mxu0 %v694
        %760 = vmatprep.subr.bf16.mxu0 %v697
        %761 = vmatpush1.bf16.msra.mxu0 %v696
        %762 = vmatprep.mubr.bf16.mxu0 %v301
        %763 = vmatmul.mubr.bf16.gmra.mrb[0].mxu0 %v300
        %v764 = vpop.f32.mrb[0].mxu0
        %v765 = vadd.f32 %v564, %v764
        %v766 = vpop.f32.mrb[0].mxu0
        %v767 = vadd.f32 %v566, %v766
        %v768 = vpop.f32.mrb[0].mxu0
        %v769 = vpop.f32.mrb[0].mxu0
        %770 = vdwg.mxu0
        %v771 = vpack.c.bf16 %v298, %v298
        %v772 = vpack.c.bf16 %v299, %v299
        %s773 = scalar_lea.vmem [#allocation5], 512
        %v774 = vld [vmem:[%s773] sm:$0xff]
        %v775 = vld [vmem:[%s773 + $0x8] sm:$0xff]
        %v776 = vld [vmem:[%s773 + $0x10] sm:$0xff]
        %v777 = vld [vmem:[%s773 + $0x18] sm:$0xff]
        %v778 = vld [vmem:[%s773 + $0x20] sm:$0xff]
        %v779 = vld [vmem:[%s773 + $0x28] sm:$0xff]
        %v780 = vld [vmem:[%s773 + $0x30] sm:$0xff]
        %v781 = vld [vmem:[%s773 + $0x38] sm:$0xff]
        %v782 = vld [vmem:[%s773 + $0x40] sm:$0xff]
        %v783 = vld [vmem:[%s773 + $0x48] sm:$0xff]
        %v784 = vld [vmem:[%s773 + $0x50] sm:$0xff]
        %v785 = vld [vmem:[%s773 + $0x58] sm:$0xff]
        %v786 = vld [vmem:[%s773 + $0x60] sm:$0xff]
        %v787 = vld [vmem:[%s773 + $0x68] sm:$0xff]
        %v788 = vld [vmem:[%s773 + $0x70] sm:$0xff]
        %v789 = vld [vmem:[%s773 + $0x78] sm:$0xff]
        %v790 = vld [vmem:[%s773 + $0x80] sm:$0xff]
        %v791 = vld [vmem:[%s773 + $0x88] sm:$0xff]
        %v792 = vld [vmem:[%s773 + $0x90] sm:$0xff]
        %v793 = vld [vmem:[%s773 + $0x98] sm:$0xff]
        %v794 = vld [vmem:[%s773 + $0xa0] sm:$0xff]
        %v795 = vld [vmem:[%s773 + $0xa8] sm:$0xff]
        %v796 = vld [vmem:[%s773 + $0xb0] sm:$0xff]
        %v797 = vld [vmem:[%s773 + $0xb8] sm:$0xff]
        %v798 = vld [vmem:[%s773 + $0xc0] sm:$0xff]
        %v799 = vld [vmem:[%s773 + $0xc8] sm:$0xff]
        %v800 = vld [vmem:[%s773 + $0xd0] sm:$0xff]
        %v801 = vld [vmem:[%s773 + $0xd8] sm:$0xff]
        %v802 = vld [vmem:[%s773 + $0xe0] sm:$0xff]
        %v803 = vld [vmem:[%s773 + $0xe8] sm:$0xff]
        %v804 = vld [vmem:[%s773 + $0xf0] sm:$0xff]
        %v805 = vld [vmem:[%s773 + $0xf8] sm:$0xff]
        %v838 = vunpack.c.l.b16 %v774
        %v839 = vunpack.c.h.b16 %v774
        %v840 = vunpack.c.l.b16 %v775
        %v841 = vunpack.c.h.b16 %v775
        %v842 = vunpack.c.l.b16 %v776
        %v843 = vunpack.c.h.b16 %v776
        %v844 = vunpack.c.l.b16 %v777
        %v845 = vunpack.c.h.b16 %v777
        %v846 = vunpack.c.l.b16 %v778
        %v847 = vunpack.c.h.b16 %v778
        %v848 = vunpack.c.l.b16 %v779
        %v849 = vunpack.c.h.b16 %v779
        %v850 = vunpack.c.l.b16 %v780
        %v851 = vunpack.c.h.b16 %v780
        %v852 = vunpack.c.l.b16 %v781
        %v853 = vunpack.c.h.b16 %v781
        %v854 = vunpack.c.l.b16 %v782
        %v855 = vunpack.c.h.b16 %v782
        %v856 = vunpack.c.l.b16 %v783
        %v857 = vunpack.c.h.b16 %v783
        %v858 = vunpack.c.l.b16 %v784
        %v859 = vunpack.c.h.b16 %v784
        %v860 = vunpack.c.l.b16 %v785
        %v861 = vunpack.c.h.b16 %v785
        %v862 = vunpack.c.l.b16 %v786
        %v863 = vunpack.c.h.b16 %v786
        %v864 = vunpack.c.l.b16 %v787
        %v865 = vunpack.c.h.b16 %v787
        %v866 = vunpack.c.l.b16 %v788
        %v867 = vunpack.c.h.b16 %v788
        %v868 = vunpack.c.l.b16 %v789
        %v869 = vunpack.c.h.b16 %v789
        %v870 = vunpack.c.l.b16 %v790
        %v871 = vunpack.c.h.b16 %v790
        %v872 = vunpack.c.l.b16 %v791
        %v873 = vunpack.c.h.b16 %v791
        %v874 = vunpack.c.l.b16 %v792
        %v875 = vunpack.c.h.b16 %v792
        %v876 = vunpack.c.l.b16 %v793
        %v877 = vunpack.c.h.b16 %v793
        %v878 = vunpack.c.l.b16 %v794
        %v879 = vunpack.c.h.b16 %v794
        %v880 = vunpack.c.l.b16 %v795
        %v881 = vunpack.c.h.b16 %v795
        %v882 = vunpack.c.l.b16 %v796
        %v883 = vunpack.c.h.b16 %v796
        %v884 = vunpack.c.l.b16 %v797
        %v885 = vunpack.c.h.b16 %v797
        %v886 = vunpack.c.l.b16 %v798
        %v887 = vunpack.c.h.b16 %v798
        %v888 = vunpack.c.l.b16 %v799
        %v889 = vunpack.c.h.b16 %v799
        %v890 = vunpack.c.l.b16 %v800
        %v891 = vunpack.c.h.b16 %v800
        %v892 = vunpack.c.l.b16 %v801
        %v893 = vunpack.c.h.b16 %v801
        %v894 = vunpack.c.l.b16 %v802
        %v895 = vunpack.c.h.b16 %v802
        %v896 = vunpack.c.l.b16 %v803
        %v897 = vunpack.c.h.b16 %v803
        %v898 = vunpack.c.l.b16 %v804
        %v899 = vunpack.c.h.b16 %v804
        %v900 = vunpack.c.l.b16 %v805
        %v901 = vunpack.c.h.b16 %v805
        %v902 = vpack.c.b16 %v840, %v838
        %v903 = vpack.c.b16 %v841, %v839
        %v904 = vpack.c.b16 %v844, %v842
        %v905 = vpack.c.b16 %v845, %v843
        %v906 = vpack.c.b16 %v848, %v846
        %v907 = vpack.c.b16 %v849, %v847
        %v908 = vpack.c.b16 %v852, %v850
        %v909 = vpack.c.b16 %v853, %v851
        %v910 = vpack.c.b16 %v856, %v854
        %v911 = vpack.c.b16 %v857, %v855
        %v912 = vpack.c.b16 %v860, %v858
        %v913 = vpack.c.b16 %v861, %v859
        %v914 = vpack.c.b16 %v864, %v862
        %v915 = vpack.c.b16 %v865, %v863
        %v916 = vpack.c.b16 %v868, %v866
        %v917 = vpack.c.b16 %v869, %v867
        %v918 = vpack.c.b16 %v872, %v870
        %v919 = vpack.c.b16 %v873, %v871
        %v920 = vpack.c.b16 %v876, %v874
        %v921 = vpack.c.b16 %v877, %v875
        %v922 = vpack.c.b16 %v880, %v878
        %v923 = vpack.c.b16 %v881, %v879
        %v924 = vpack.c.b16 %v884, %v882
        %v925 = vpack.c.b16 %v885, %v883
        %v926 = vpack.c.b16 %v888, %v886
        %v927 = vpack.c.b16 %v889, %v887
        %v928 = vpack.c.b16 %v892, %v890
        %v929 = vpack.c.b16 %v893, %v891
        %v930 = vpack.c.b16 %v896, %v894
        %v931 = vpack.c.b16 %v897, %v895
        %v932 = vpack.c.b16 %v900, %v898
        %v933 = vpack.c.b16 %v901, %v899
        %966 = vmatprep.subr.bf16.mxu0 %v903
        %967 = vmatpush1.bf16.msra.mxu0 %v902
        %968 = vmatprep.subr.bf16.mxu0 %v905
        %969 = vmatpush1.bf16.msra.mxu0 %v904
        %970 = vmatprep.subr.bf16.mxu0 %v907
        %971 = vmatpush1.bf16.msra.mxu0 %v906
        %972 = vmatprep.subr.bf16.mxu0 %v909
        %973 = vmatpush1.bf16.msra.mxu0 %v908
        %974 = vmatprep.subr.bf16.mxu0 %v911
        %975 = vmatpush1.bf16.msra.mxu0 %v910
        %976 = vmatprep.subr.bf16.mxu0 %v913
        %977 = vmatpush1.bf16.msra.mxu0 %v912
        %978 = vmatprep.subr.bf16.mxu0 %v915
        %979 = vmatpush1.bf16.msra.mxu0 %v914
        %980 = vmatprep.subr.bf16.mxu0 %v917
        %981 = vmatpush1.bf16.msra.mxu0 %v916
        %982 = vmatprep.subr.bf16.mxu0 %v919
        %983 = vmatpush1.bf16.msra.mxu0 %v918
        %984 = vmatprep.subr.bf16.mxu0 %v921
        %985 = vmatpush1.bf16.msra.mxu0 %v920
        %986 = vmatprep.subr.bf16.mxu0 %v923
        %987 = vmatpush1.bf16.msra.mxu0 %v922
        %988 = vmatprep.subr.bf16.mxu0 %v925
        %989 = vmatpush1.bf16.msra.mxu0 %v924
        %990 = vmatprep.subr.bf16.mxu0 %v927
        %991 = vmatpush1.bf16.msra.mxu0 %v926
        %992 = vmatprep.subr.bf16.mxu0 %v929
        %993 = vmatpush1.bf16.msra.mxu0 %v928
        %994 = vmatprep.subr.bf16.mxu0 %v931
        %995 = vmatpush1.bf16.msra.mxu0 %v930
        %996 = vmatprep.subr.bf16.mxu0 %v933
        %997 = vmatpush1.bf16.msra.mxu0 %v932
        %998 = vmatprep.mubr.bf16.mxu0 %v772
        %999 = vmatmul.mubr.bf16.gmra.mrb[0].mxu0 %v771
        %v1000 = vpop.f32.mrb[0].mxu0
        %v1001 = vadd.f32 0.0, %v1000
        %v1002 = vpop.f32.mrb[0].mxu0
        %v1003 = vadd.f32 0.0, %v1002
        %v1004 = vpop.f32.mrb[0].mxu0
        %v1005 = vpop.f32.mrb[0].mxu0
        %1006 = vdwg.mxu0
        %v1007 = vadd.f32 %v765, %v1001
        %v1008 = vadd.f32 %v767, %v1003
        %v1009 = vld [vmem:[%s2] sm:$0x3]
        %v1011 = vlaneseq
        %v1012 = vshrl.u32 %v1011, 7
        %v1013 = vsub.s32 0, %v1012
        %v1014 = vrot.slane %v1009, %v1013
        %v1015 = vlaneseq
        %v1016 = vshrl.u32 %v1015, 7
        %v1017 = vsub.s32 1, %v1016
        %v1018 = vrot.slane %v1009, %v1017
        %v1021 = vadd.f32 %v1007, %v1014
        %v1022 = vadd.f32 %v1008, %v1018
        %v1023 = vmax.f32 %v1021, 0.0
        %v1024 = vmax.f32 %v1022, 0.0
        %v1025 = vrot.slane %v1023, 7
        %v1026 = vrot.slane %v1024, 7
        %v1027 = vsel %vm291, %v1025, 0.0
        %v1028 = vsel %vm291, %v1026, 0.0
        %v1029 = vrot.slane %v1023, 1
        %v1030 = vrot.slane %v1024, 1
        %v1031 = vsel %vm297, %v1029, 0.0
        %v1032 = vsel %vm297, %v1030, 0.0
        %v1033 = vpack.c.bf16 %v1027, %v1027
        %v1034 = vpack.c.bf16 %v1028, %v1028
        %v1035 = vld [vmem:[#allocation7] sm:$0xff]
        %v1036 = vld [vmem:[#allocation7 + $0x8] sm:$0xff]
        %v1037 = vld [vmem:[#allocation7 + $0x10] sm:$0xff]
        %v1038 = vld [vmem:[#allocation7 + $0x18] sm:$0xff]
        %v1039 = vld [vmem:[#allocation7 + $0x20] sm:$0xff]
        %v1040 = vld [vmem:[#allocation7 + $0x28] sm:$0xff]
        %v1041 = vld [vmem:[#allocation7 + $0x30] sm:$0xff]
        %v1042 = vld [vmem:[#allocation7 + $0x38] sm:$0xff]
        %v1043 = vld [vmem:[#allocation7 + $0x40] sm:$0xff]
        %v1044 = vld [vmem:[#allocation7 + $0x48] sm:$0xff]
        %v1045 = vld [vmem:[#allocation7 + $0x50] sm:$0xff]
        %v1046 = vld [vmem:[#allocation7 + $0x58] sm:$0xff]
        %v1047 = vld [vmem:[#allocation7 + $0x60] sm:$0xff]
        %v1048 = vld [vmem:[#allocation7 + $0x68] sm:$0xff]
        %v1049 = vld [vmem:[#allocation7 + $0x70] sm:$0xff]
        %v1050 = vld [vmem:[#allocation7 + $0x78] sm:$0xff]
        %v1051 = vld [vmem:[#allocation7 + $0x80] sm:$0xff]
        %v1052 = vld [vmem:[#allocation7 + $0x88] sm:$0xff]
        %v1053 = vld [vmem:[#allocation7 + $0x90] sm:$0xff]
        %v1054 = vld [vmem:[#allocation7 + $0x98] sm:$0xff]
        %v1055 = vld [vmem:[#allocation7 + $0xa0] sm:$0xff]
        %v1056 = vld [vmem:[#allocation7 + $0xa8] sm:$0xff]
        %v1057 = vld [vmem:[#allocation7 + $0xb0] sm:$0xff]
        %v1058 = vld [vmem:[#allocation7 + $0xb8] sm:$0xff]
        %v1059 = vld [vmem:[#allocation7 + $0xc0] sm:$0xff]
        %v1060 = vld [vmem:[#allocation7 + $0xc8] sm:$0xff]
        %v1061 = vld [vmem:[#allocation7 + $0xd0] sm:$0xff]
        %v1062 = vld [vmem:[#allocation7 + $0xd8] sm:$0xff]
        %v1063 = vld [vmem:[#allocation7 + $0xe0] sm:$0xff]
        %v1064 = vld [vmem:[#allocation7 + $0xe8] sm:$0xff]
        %v1065 = vld [vmem:[#allocation7 + $0xf0] sm:$0xff]
        %v1066 = vld [vmem:[#allocation7 + $0xf8] sm:$0xff]
        %v1067 = vpack.c.bf16 %v1023, %v1023
        %v1068 = vpack.c.bf16 %v1024, %v1024
        %s1069 = scalar_lea.vmem [#allocation7], 256
        %v1070 = vld [vmem:[%s1069] sm:$0xff]
        %v1071 = vld [vmem:[%s1069 + $0x8] sm:$0xff]
        %v1072 = vld [vmem:[%s1069 + $0x10] sm:$0xff]
        %v1073 = vld [vmem:[%s1069 + $0x18] sm:$0xff]
        %v1074 = vld [vmem:[%s1069 + $0x20] sm:$0xff]
        %v1075 = vld [vmem:[%s1069 + $0x28] sm:$0xff]
        %v1076 = vld [vmem:[%s1069 + $0x30] sm:$0xff]
        %v1077 = vld [vmem:[%s1069 + $0x38] sm:$0xff]
        %v1078 = vld [vmem:[%s1069 + $0x40] sm:$0xff]
        %v1079 = vld [vmem:[%s1069 + $0x48] sm:$0xff]
        %v1080 = vld [vmem:[%s1069 + $0x50] sm:$0xff]
        %v1081 = vld [vmem:[%s1069 + $0x58] sm:$0xff]
        %v1082 = vld [vmem:[%s1069 + $0x60] sm:$0xff]
        %v1083 = vld [vmem:[%s1069 + $0x68] sm:$0xff]
        %v1084 = vld [vmem:[%s1069 + $0x70] sm:$0xff]
        %v1085 = vld [vmem:[%s1069 + $0x78] sm:$0xff]
        %v1086 = vld [vmem:[%s1069 + $0x80] sm:$0xff]
        %v1087 = vld [vmem:[%s1069 + $0x88] sm:$0xff]
        %v1088 = vld [vmem:[%s1069 + $0x90] sm:$0xff]
        %v1089 = vld [vmem:[%s1069 + $0x98] sm:$0xff]
        %v1090 = vld [vmem:[%s1069 + $0xa0] sm:$0xff]
        %v1091 = vld [vmem:[%s1069 + $0xa8] sm:$0xff]
        %v1092 = vld [vmem:[%s1069 + $0xb0] sm:$0xff]
        %v1093 = vld [vmem:[%s1069 + $0xb8] sm:$0xff]
        %v1094 = vld [vmem:[%s1069 + $0xc0] sm:$0xff]
        %v1095 = vld [vmem:[%s1069 + $0xc8] sm:$0xff]
        %v1096 = vld [vmem:[%s1069 + $0xd0] sm:$0xff]
        %v1097 = vld [vmem:[%s1069 + $0xd8] sm:$0xff]
        %v1098 = vld [vmem:[%s1069 + $0xe0] sm:$0xff]
        %v1099 = vld [vmem:[%s1069 + $0xe8] sm:$0xff]
        %v1100 = vld [vmem:[%s1069 + $0xf0] sm:$0xff]
        %v1101 = vld [vmem:[%s1069 + $0xf8] sm:$0xff]
        %v1134 = vunpack.c.l.b16 %v1070
        %v1135 = vunpack.c.h.b16 %v1070
        %v1136 = vunpack.c.l.b16 %v1071
        %v1137 = vunpack.c.h.b16 %v1071
        %v1138 = vunpack.c.l.b16 %v1072
        %v1139 = vunpack.c.h.b16 %v1072
        %v1140 = vunpack.c.l.b16 %v1073
        %v1141 = vunpack.c.h.b16 %v1073
        %v1142 = vunpack.c.l.b16 %v1074
        %v1143 = vunpack.c.h.b16 %v1074
        %v1144 = vunpack.c.l.b16 %v1075
        %v1145 = vunpack.c.h.b16 %v1075
        %v1146 = vunpack.c.l.b16 %v1076
        %v1147 = vunpack.c.h.b16 %v1076
        %v1148 = vunpack.c.l.b16 %v1077
        %v1149 = vunpack.c.h.b16 %v1077
        %v1150 = vunpack.c.l.b16 %v1078
        %v1151 = vunpack.c.h.b16 %v1078
        %v1152 = vunpack.c.l.b16 %v1079
        %v1153 = vunpack.c.h.b16 %v1079
        %v1154 = vunpack.c.l.b16 %v1080
        %v1155 = vunpack.c.h.b16 %v1080
        %v1156 = vunpack.c.l.b16 %v1081
        %v1157 = vunpack.c.h.b16 %v1081
        %v1158 = vunpack.c.l.b16 %v1082
        %v1159 = vunpack.c.h.b16 %v1082
        %v1160 = vunpack.c.l.b16 %v1083
        %v1161 = vunpack.c.h.b16 %v1083
        %v1162 = vunpack.c.l.b16 %v1084
        %v1163 = vunpack.c.h.b16 %v1084
        %v1164 = vunpack.c.l.b16 %v1085
        %v1165 = vunpack.c.h.b16 %v1085
        %v1166 = vunpack.c.l.b16 %v1086
        %v1167 = vunpack.c.h.b16 %v1086
        %v1168 = vunpack.c.l.b16 %v1087
        %v1169 = vunpack.c.h.b16 %v1087
        %v1170 = vunpack.c.l.b16 %v1088
        %v1171 = vunpack.c.h.b16 %v1088
        %v1172 = vunpack.c.l.b16 %v1089
        %v1173 = vunpack.c.h.b16 %v1089
        %v1174 = vunpack.c.l.b16 %v1090
        %v1175 = vunpack.c.h.b16 %v1090
        %v1176 = vunpack.c.l.b16 %v1091
        %v1177 = vunpack.c.h.b16 %v1091
        %v1178 = vunpack.c.l.b16 %v1092
        %v1179 = vunpack.c.h.b16 %v1092
        %v1180 = vunpack.c.l.b16 %v1093
        %v1181 = vunpack.c.h.b16 %v1093
        %v1182 = vunpack.c.l.b16 %v1094
        %v1183 = vunpack.c.h.b16 %v1094
        %v1184 = vunpack.c.l.b16 %v1095
        %v1185 = vunpack.c.h.b16 %v1095
        %v1186 = vunpack.c.l.b16 %v1096
        %v1187 = vunpack.c.h.b16 %v1096
        %v1188 = vunpack.c.l.b16 %v1097
        %v1189 = vunpack.c.h.b16 %v1097
        %v1190 = vunpack.c.l.b16 %v1098
        %v1191 = vunpack.c.h.b16 %v1098
        %v1192 = vunpack.c.l.b16 %v1099
        %v1193 = vunpack.c.h.b16 %v1099
        %v1194 = vunpack.c.l.b16 %v1100
        %v1195 = vunpack.c.h.b16 %v1100
        %v1196 = vunpack.c.l.b16 %v1101
        %v1197 = vunpack.c.h.b16 %v1101
        %v1198 = vpack.c.b16 %v1136, %v1134
        %v1199 = vpack.c.b16 %v1137, %v1135
        %v1200 = vpack.c.b16 %v1140, %v1138
        %v1201 = vpack.c.b16 %v1141, %v1139
        %v1202 = vpack.c.b16 %v1144, %v1142
        %v1203 = vpack.c.b16 %v1145, %v1143
        %v1204 = vpack.c.b16 %v1148, %v1146
        %v1205 = vpack.c.b16 %v1149, %v1147
        %v1206 = vpack.c.b16 %v1152, %v1150
        %v1207 = vpack.c.b16 %v1153, %v1151
        %v1208 = vpack.c.b16 %v1156, %v1154
        %v1209 = vpack.c.b16 %v1157, %v1155
        %v1210 = vpack.c.b16 %v1160, %v1158
        %v1211 = vpack.c.b16 %v1161, %v1159
        %v1212 = vpack.c.b16 %v1164, %v1162
        %v1213 = vpack.c.b16 %v1165, %v1163
        %v1214 = vpack.c.b16 %v1168, %v1166
        %v1215 = vpack.c.b16 %v1169, %v1167
        %v1216 = vpack.c.b16 %v1172, %v1170
        %v1217 = vpack.c.b16 %v1173, %v1171
        %v1218 = vpack.c.b16 %v1176, %v1174
        %v1219 = vpack.c.b16 %v1177, %v1175
        %v1220 = vpack.c.b16 %v1180, %v1178
        %v1221 = vpack.c.b16 %v1181, %v1179
        %v1222 = vpack.c.b16 %v1184, %v1182
        %v1223 = vpack.c.b16 %v1185, %v1183
        %v1224 = vpack.c.b16 %v1188, %v1186
        %v1225 = vpack.c.b16 %v1189, %v1187
        %v1226 = vpack.c.b16 %v1192, %v1190
        %v1227 = vpack.c.b16 %v1193, %v1191
        %v1228 = vpack.c.b16 %v1196, %v1194
        %v1229 = vpack.c.b16 %v1197, %v1195
        %1262 = vmatprep.subr.bf16.mxu0 %v1199
        %1263 = vmatpush1.bf16.msra.mxu0 %v1198
        %1264 = vmatprep.subr.bf16.mxu0 %v1201
        %1265 = vmatpush1.bf16.msra.mxu0 %v1200
        %1266 = vmatprep.subr.bf16.mxu0 %v1203
        %1267 = vmatpush1.bf16.msra.mxu0 %v1202
        %1268 = vmatprep.subr.bf16.mxu0 %v1205
        %1269 = vmatpush1.bf16.msra.mxu0 %v1204
        %1270 = vmatprep.subr.bf16.mxu0 %v1207
        %1271 = vmatpush1.bf16.msra.mxu0 %v1206
        %1272 = vmatprep.subr.bf16.mxu0 %v1209
        %1273 = vmatpush1.bf16.msra.mxu0 %v1208
        %1274 = vmatprep.subr.bf16.mxu0 %v1211
        %1275 = vmatpush1.bf16.msra.mxu0 %v1210
        %1276 = vmatprep.subr.bf16.mxu0 %v1213
        %1277 = vmatpush1.bf16.msra.mxu0 %v1212
        %1278 = vmatprep.subr.bf16.mxu0 %v1215
        %1279 = vmatpush1.bf16.msra.mxu0 %v1214
        %1280 = vmatprep.subr.bf16.mxu0 %v1217
        %1281 = vmatpush1.bf16.msra.mxu0 %v1216
        %1282 = vmatprep.subr.bf16.mxu0 %v1219
        %1283 = vmatpush1.bf16.msra.mxu0 %v1218
        %1284 = vmatprep.subr.bf16.mxu0 %v1221
        %1285 = vmatpush1.bf16.msra.mxu0 %v1220
        %1286 = vmatprep.subr.bf16.mxu0 %v1223
        %1287 = vmatpush1.bf16.msra.mxu0 %v1222
        %1288 = vmatprep.subr.bf16.mxu0 %v1225
        %1289 = vmatpush1.bf16.msra.mxu0 %v1224
        %1290 = vmatprep.subr.bf16.mxu0 %v1227
        %1291 = vmatpush1.bf16.msra.mxu0 %v1226
        %1292 = vmatprep.subr.bf16.mxu0 %v1229
        %1293 = vmatpush1.bf16.msra.mxu0 %v1228
        %1294 = vmatprep.mubr.bf16.mxu0 %v1068
        %1295 = vmatmul.mubr.bf16.gmra.mrb[0].mxu0 %v1067
        %v1296 = vpop.f32.mrb[0].mxu0
        %v1297 = vadd.f32 0.0, %v1296
        %v1298 = vpop.f32.mrb[0].mxu0
        %v1299 = vadd.f32 0.0, %v1298
        %v1300 = vpop.f32.mrb[0].mxu0
        %v1301 = vpop.f32.mrb[0].mxu0
        %1302 = vdwg.mxu0
        %v1335 = vunpack.c.l.b16 %v1035
        %v1336 = vunpack.c.h.b16 %v1035
        %v1337 = vunpack.c.l.b16 %v1036
        %v1338 = vunpack.c.h.b16 %v1036
        %v1339 = vunpack.c.l.b16 %v1037
        %v1340 = vunpack.c.h.b16 %v1037
        %v1341 = vunpack.c.l.b16 %v1038
        %v1342 = vunpack.c.h.b16 %v1038
        %v1343 = vunpack.c.l.b16 %v1039
        %v1344 = vunpack.c.h.b16 %v1039
        %v1345 = vunpack.c.l.b16 %v1040
        %v1346 = vunpack.c.h.b16 %v1040
        %v1347 = vunpack.c.l.b16 %v1041
        %v1348 = vunpack.c.h.b16 %v1041
        %v1349 = vunpack.c.l.b16 %v1042
        %v1350 = vunpack.c.h.b16 %v1042
        %v1351 = vunpack.c.l.b16 %v1043
        %v1352 = vunpack.c.h.b16 %v1043
        %v1353 = vunpack.c.l.b16 %v1044
        %v1354 = vunpack.c.h.b16 %v1044
        %v1355 = vunpack.c.l.b16 %v1045
        %v1356 = vunpack.c.h.b16 %v1045
        %v1357 = vunpack.c.l.b16 %v1046
        %v1358 = vunpack.c.h.b16 %v1046
        %v1359 = vunpack.c.l.b16 %v1047
        %v1360 = vunpack.c.h.b16 %v1047
        %v1361 = vunpack.c.l.b16 %v1048
        %v1362 = vunpack.c.h.b16 %v1048
        %v1363 = vunpack.c.l.b16 %v1049
        %v1364 = vunpack.c.h.b16 %v1049
        %v1365 = vunpack.c.l.b16 %v1050
        %v1366 = vunpack.c.h.b16 %v1050
        %v1367 = vunpack.c.l.b16 %v1051
        %v1368 = vunpack.c.h.b16 %v1051
        %v1369 = vunpack.c.l.b16 %v1052
        %v1370 = vunpack.c.h.b16 %v1052
        %v1371 = vunpack.c.l.b16 %v1053
        %v1372 = vunpack.c.h.b16 %v1053
        %v1373 = vunpack.c.l.b16 %v1054
        %v1374 = vunpack.c.h.b16 %v1054
        %v1375 = vunpack.c.l.b16 %v1055
        %v1376 = vunpack.c.h.b16 %v1055
        %v1377 = vunpack.c.l.b16 %v1056
        %v1378 = vunpack.c.h.b16 %v1056
        %v1379 = vunpack.c.l.b16 %v1057
        %v1380 = vunpack.c.h.b16 %v1057
        %v1381 = vunpack.c.l.b16 %v1058
        %v1382 = vunpack.c.h.b16 %v1058
        %v1383 = vunpack.c.l.b16 %v1059
        %v1384 = vunpack.c.h.b16 %v1059
        %v1385 = vunpack.c.l.b16 %v1060
        %v1386 = vunpack.c.h.b16 %v1060
        %v1387 = vunpack.c.l.b16 %v1061
        %v1388 = vunpack.c.h.b16 %v1061
        %v1389 = vunpack.c.l.b16 %v1062
        %v1390 = vunpack.c.h.b16 %v1062
        %v1391 = vunpack.c.l.b16 %v1063
        %v1392 = vunpack.c.h.b16 %v1063
        %v1393 = vunpack.c.l.b16 %v1064
        %v1394 = vunpack.c.h.b16 %v1064
        %v1395 = vunpack.c.l.b16 %v1065
        %v1396 = vunpack.c.h.b16 %v1065
        %v1397 = vunpack.c.l.b16 %v1066
        %v1398 = vunpack.c.h.b16 %v1066
        %v1399 = vpack.c.b16 %v1337, %v1335
        %v1400 = vpack.c.b16 %v1338, %v1336
        %v1401 = vpack.c.b16 %v1341, %v1339
        %v1402 = vpack.c.b16 %v1342, %v1340
        %v1403 = vpack.c.b16 %v1345, %v1343
        %v1404 = vpack.c.b16 %v1346, %v1344
        %v1405 = vpack.c.b16 %v1349, %v1347
        %v1406 = vpack.c.b16 %v1350, %v1348
        %v1407 = vpack.c.b16 %v1353, %v1351
        %v1408 = vpack.c.b16 %v1354, %v1352
        %v1409 = vpack.c.b16 %v1357, %v1355
        %v1410 = vpack.c.b16 %v1358, %v1356
        %v1411 = vpack.c.b16 %v1361, %v1359
        %v1412 = vpack.c.b16 %v1362, %v1360
        %v1413 = vpack.c.b16 %v1365, %v1363
        %v1414 = vpack.c.b16 %v1366, %v1364
        %v1415 = vpack.c.b16 %v1369, %v1367
        %v1416 = vpack.c.b16 %v1370, %v1368
        %v1417 = vpack.c.b16 %v1373, %v1371
        %v1418 = vpack.c.b16 %v1374, %v1372
        %v1419 = vpack.c.b16 %v1377, %v1375
        %v1420 = vpack.c.b16 %v1378, %v1376
        %v1421 = vpack.c.b16 %v1381, %v1379
        %v1422 = vpack.c.b16 %v1382, %v1380
        %v1423 = vpack.c.b16 %v1385, %v1383
        %v1424 = vpack.c.b16 %v1386, %v1384
        %v1425 = vpack.c.b16 %v1389, %v1387
        %v1426 = vpack.c.b16 %v1390, %v1388
        %v1427 = vpack.c.b16 %v1393, %v1391
        %v1428 = vpack.c.b16 %v1394, %v1392
        %v1429 = vpack.c.b16 %v1397, %v1395
        %v1430 = vpack.c.b16 %v1398, %v1396
        %1463 = vmatprep.subr.bf16.mxu0 %v1400
        %1464 = vmatpush1.bf16.msra.mxu0 %v1399
        %1465 = vmatprep.subr.bf16.mxu0 %v1402
        %1466 = vmatpush1.bf16.msra.mxu0 %v1401
        %1467 = vmatprep.subr.bf16.mxu0 %v1404
        %1468 = vmatpush1.bf16.msra.mxu0 %v1403
        %1469 = vmatprep.subr.bf16.mxu0 %v1406
        %1470 = vmatpush1.bf16.msra.mxu0 %v1405
        %1471 = vmatprep.subr.bf16.mxu0 %v1408
        %1472 = vmatpush1.bf16.msra.mxu0 %v1407
        %1473 = vmatprep.subr.bf16.mxu0 %v1410
        %1474 = vmatpush1.bf16.msra.mxu0 %v1409
        %1475 = vmatprep.subr.bf16.mxu0 %v1412
        %1476 = vmatpush1.bf16.msra.mxu0 %v1411
        %1477 = vmatprep.subr.bf16.mxu0 %v1414
        %1478 = vmatpush1.bf16.msra.mxu0 %v1413
        %1479 = vmatprep.subr.bf16.mxu0 %v1416
        %1480 = vmatpush1.bf16.msra.mxu0 %v1415
        %1481 = vmatprep.subr.bf16.mxu0 %v1418
        %1482 = vmatpush1.bf16.msra.mxu0 %v1417
        %1483 = vmatprep.subr.bf16.mxu0 %v1420
        %1484 = vmatpush1.bf16.msra.mxu0 %v1419
        %1485 = vmatprep.subr.bf16.mxu0 %v1422
        %1486 = vmatpush1.bf16.msra.mxu0 %v1421
        %1487 = vmatprep.subr.bf16.mxu0 %v1424
        %1488 = vmatpush1.bf16.msra.mxu0 %v1423
        %1489 = vmatprep.subr.bf16.mxu0 %v1426
        %1490 = vmatpush1.bf16.msra.mxu0 %v1425
        %1491 = vmatprep.subr.bf16.mxu0 %v1428
        %1492 = vmatpush1.bf16.msra.mxu0 %v1427
        %1493 = vmatprep.subr.bf16.mxu0 %v1430
        %1494 = vmatpush1.bf16.msra.mxu0 %v1429
        %1495 = vmatprep.mubr.bf16.mxu0 %v1034
        %1496 = vmatmul.mubr.bf16.gmra.mrb[0].mxu0 %v1033
        %v1497 = vpop.f32.mrb[0].mxu0
        %v1498 = vadd.f32 %v1297, %v1497
        %v1499 = vpop.f32.mrb[0].mxu0
        %v1500 = vadd.f32 %v1299, %v1499
        %v1501 = vpop.f32.mrb[0].mxu0
        %v1502 = vpop.f32.mrb[0].mxu0
        %1503 = vdwg.mxu0
        %v1504 = vpack.c.bf16 %v1031, %v1031
        %v1505 = vpack.c.bf16 %v1032, %v1032
        %s1506 = scalar_lea.vmem [#allocation7], 512
        %v1507 = vld [vmem:[%s1506] sm:$0xff]
        %v1508 = vld [vmem:[%s1506 + $0x8] sm:$0xff]
        %v1509 = vld [vmem:[%s1506 + $0x10] sm:$0xff]
        %v1510 = vld [vmem:[%s1506 + $0x18] sm:$0xff]
        %v1511 = vld [vmem:[%s1506 + $0x20] sm:$0xff]
        %v1512 = vld [vmem:[%s1506 + $0x28] sm:$0xff]
        %v1513 = vld [vmem:[%s1506 + $0x30] sm:$0xff]
        %v1514 = vld [vmem:[%s1506 + $0x38] sm:$0xff]
        %v1515 = vld [vmem:[%s1506 + $0x40] sm:$0xff]
        %v1516 = vld [vmem:[%s1506 + $0x48] sm:$0xff]
        %v1517 = vld [vmem:[%s1506 + $0x50] sm:$0xff]
        %v1518 = vld [vmem:[%s1506 + $0x58] sm:$0xff]
        %v1519 = vld [vmem:[%s1506 + $0x60] sm:$0xff]
        %v1520 = vld [vmem:[%s1506 + $0x68] sm:$0xff]
        %v1521 = vld [vmem:[%s1506 + $0x70] sm:$0xff]
        %v1522 = vld [vmem:[%s1506 + $0x78] sm:$0xff]
        %v1523 = vld [vmem:[%s1506 + $0x80] sm:$0xff]
        %v1524 = vld [vmem:[%s1506 + $0x88] sm:$0xff]
        %v1525 = vld [vmem:[%s1506 + $0x90] sm:$0xff]
        %v1526 = vld [vmem:[%s1506 + $0x98] sm:$0xff]
        %v1527 = vld [vmem:[%s1506 + $0xa0] sm:$0xff]
        %v1528 = vld [vmem:[%s1506 + $0xa8] sm:$0xff]
        %v1529 = vld [vmem:[%s1506 + $0xb0] sm:$0xff]
        %v1530 = vld [vmem:[%s1506 + $0xb8] sm:$0xff]
        %v1531 = vld [vmem:[%s1506 + $0xc0] sm:$0xff]
        %v1532 = vld [vmem:[%s1506 + $0xc8] sm:$0xff]
        %v1533 = vld [vmem:[%s1506 + $0xd0] sm:$0xff]
        %v1534 = vld [vmem:[%s1506 + $0xd8] sm:$0xff]
        %v1535 = vld [vmem:[%s1506 + $0xe0] sm:$0xff]
        %v1536 = vld [vmem:[%s1506 + $0xe8] sm:$0xff]
        %v1537 = vld [vmem:[%s1506 + $0xf0] sm:$0xff]
        %v1538 = vld [vmem:[%s1506 + $0xf8] sm:$0xff]
        %v1571 = vunpack.c.l.b16 %v1507
        %v1572 = vunpack.c.h.b16 %v1507
        %v1573 = vunpack.c.l.b16 %v1508
        %v1574 = vunpack.c.h.b16 %v1508
        %v1575 = vunpack.c.l.b16 %v1509
        %v1576 = vunpack.c.h.b16 %v1509
        %v1577 = vunpack.c.l.b16 %v1510
        %v1578 = vunpack.c.h.b16 %v1510
        %v1579 = vunpack.c.l.b16 %v1511
        %v1580 = vunpack.c.h.b16 %v1511
        %v1581 = vunpack.c.l.b16 %v1512
        %v1582 = vunpack.c.h.b16 %v1512
        %v1583 = vunpack.c.l.b16 %v1513
        %v1584 = vunpack.c.h.b16 %v1513
        %v1585 = vunpack.c.l.b16 %v1514
        %v1586 = vunpack.c.h.b16 %v1514
        %v1587 = vunpack.c.l.b16 %v1515
        %v1588 = vunpack.c.h.b16 %v1515
        %v1589 = vunpack.c.l.b16 %v1516
        %v1590 = vunpack.c.h.b16 %v1516
        %v1591 = vunpack.c.l.b16 %v1517
        %v1592 = vunpack.c.h.b16 %v1517
        %v1593 = vunpack.c.l.b16 %v1518
        %v1594 = vunpack.c.h.b16 %v1518
        %v1595 = vunpack.c.l.b16 %v1519
        %v1596 = vunpack.c.h.b16 %v1519
        %v1597 = vunpack.c.l.b16 %v1520
        %v1598 = vunpack.c.h.b16 %v1520
        %v1599 = vunpack.c.l.b16 %v1521
        %v1600 = vunpack.c.h.b16 %v1521
        %v1601 = vunpack.c.l.b16 %v1522
        %v1602 = vunpack.c.h.b16 %v1522
        %v1603 = vunpack.c.l.b16 %v1523
        %v1604 = vunpack.c.h.b16 %v1523
        %v1605 = vunpack.c.l.b16 %v1524
        %v1606 = vunpack.c.h.b16 %v1524
        %v1607 = vunpack.c.l.b16 %v1525
        %v1608 = vunpack.c.h.b16 %v1525
        %v1609 = vunpack.c.l.b16 %v1526
        %v1610 = vunpack.c.h.b16 %v1526
        %v1611 = vunpack.c.l.b16 %v1527
        %v1612 = vunpack.c.h.b16 %v1527
        %v1613 = vunpack.c.l.b16 %v1528
        %v1614 = vunpack.c.h.b16 %v1528
        %v1615 = vunpack.c.l.b16 %v1529
        %v1616 = vunpack.c.h.b16 %v1529
        %v1617 = vunpack.c.l.b16 %v1530
        %v1618 = vunpack.c.h.b16 %v1530
        %v1619 = vunpack.c.l.b16 %v1531
        %v1620 = vunpack.c.h.b16 %v1531
        %v1621 = vunpack.c.l.b16 %v1532
        %v1622 = vunpack.c.h.b16 %v1532
        %v1623 = vunpack.c.l.b16 %v1533
        %v1624 = vunpack.c.h.b16 %v1533
        %v1625 = vunpack.c.l.b16 %v1534
        %v1626 = vunpack.c.h.b16 %v1534
        %v1627 = vunpack.c.l.b16 %v1535
        %v1628 = vunpack.c.h.b16 %v1535
        %v1629 = vunpack.c.l.b16 %v1536
        %v1630 = vunpack.c.h.b16 %v1536
        %v1631 = vunpack.c.l.b16 %v1537
        %v1632 = vunpack.c.h.b16 %v1537
        %v1633 = vunpack.c.l.b16 %v1538
        %v1634 = vunpack.c.h.b16 %v1538
        %v1635 = vpack.c.b16 %v1573, %v1571
        %v1636 = vpack.c.b16 %v1574, %v1572
        %v1637 = vpack.c.b16 %v1577, %v1575
        %v1638 = vpack.c.b16 %v1578, %v1576
        %v1639 = vpack.c.b16 %v1581, %v1579
        %v1640 = vpack.c.b16 %v1582, %v1580
        %v1641 = vpack.c.b16 %v1585, %v1583
        %v1642 = vpack.c.b16 %v1586, %v1584
        %v1643 = vpack.c.b16 %v1589, %v1587
        %v1644 = vpack.c.b16 %v1590, %v1588
        %v1645 = vpack.c.b16 %v1593, %v1591
        %v1646 = vpack.c.b16 %v1594, %v1592
        %v1647 = vpack.c.b16 %v1597, %v1595
        %v1648 = vpack.c.b16 %v1598, %v1596
        %v1649 = vpack.c.b16 %v1601, %v1599
        %v1650 = vpack.c.b16 %v1602, %v1600
        %v1651 = vpack.c.b16 %v1605, %v1603
        %v1652 = vpack.c.b16 %v1606, %v1604
        %v1653 = vpack.c.b16 %v1609, %v1607
        %v1654 = vpack.c.b16 %v1610, %v1608
        %v1655 = vpack.c.b16 %v1613, %v1611
        %v1656 = vpack.c.b16 %v1614, %v1612
        %v1657 = vpack.c.b16 %v1617, %v1615
        %v1658 = vpack.c.b16 %v1618, %v1616
        %v1659 = vpack.c.b16 %v1621, %v1619
        %v1660 = vpack.c.b16 %v1622, %v1620
        %v1661 = vpack.c.b16 %v1625, %v1623
        %v1662 = vpack.c.b16 %v1626, %v1624
        %v1663 = vpack.c.b16 %v1629, %v1627
        %v1664 = vpack.c.b16 %v1630, %v1628
        %v1665 = vpack.c.b16 %v1633, %v1631
        %v1666 = vpack.c.b16 %v1634, %v1632
        %1699 = vmatprep.subr.bf16.mxu0 %v1636
        %1700 = vmatpush1.bf16.msra.mxu0 %v1635
        %1701 = vmatprep.subr.bf16.mxu0 %v1638
        %1702 = vmatpush1.bf16.msra.mxu0 %v1637
        %1703 = vmatprep.subr.bf16.mxu0 %v1640
        %1704 = vmatpush1.bf16.msra.mxu0 %v1639
        %1705 = vmatprep.subr.bf16.mxu0 %v1642
        %1706 = vmatpush1.bf16.msra.mxu0 %v1641
        %1707 = vmatprep.subr.bf16.mxu0 %v1644
        %1708 = vmatpush1.bf16.msra.mxu0 %v1643
        %1709 = vmatprep.subr.bf16.mxu0 %v1646
        %1710 = vmatpush1.bf16.msra.mxu0 %v1645
        %1711 = vmatprep.subr.bf16.mxu0 %v1648
        %1712 = vmatpush1.bf16.msra.mxu0 %v1647
        %1713 = vmatprep.subr.bf16.mxu0 %v1650
        %1714 = vmatpush1.bf16.msra.mxu0 %v1649
        %1715 = vmatprep.subr.bf16.mxu0 %v1652
        %1716 = vmatpush1.bf16.msra.mxu0 %v1651
        %1717 = vmatprep.subr.bf16.mxu0 %v1654
        %1718 = vmatpush1.bf16.msra.mxu0 %v1653
        %1719 = vmatprep.subr.bf16.mxu0 %v1656
        %1720 = vmatpush1.bf16.msra.mxu0 %v1655
        %1721 = vmatprep.subr.bf16.mxu0 %v1658
        %1722 = vmatpush1.bf16.msra.mxu0 %v1657
        %1723 = vmatprep.subr.bf16.mxu0 %v1660
        %1724 = vmatpush1.bf16.msra.mxu0 %v1659
        %1725 = vmatprep.subr.bf16.mxu0 %v1662
        %1726 = vmatpush1.bf16.msra.mxu0 %v1661
        %1727 = vmatprep.subr.bf16.mxu0 %v1664
        %1728 = vmatpush1.bf16.msra.mxu0 %v1663
        %1729 = vmatprep.subr.bf16.mxu0 %v1666
        %1730 = vmatpush1.bf16.msra.mxu0 %v1665
        %1731 = vmatprep.mubr.bf16.mxu0 %v1505
        %1732 = vmatmul.mubr.bf16.gmra.mrb[0].mxu0 %v1504
        %v1733 = vpop.f32.mrb[0].mxu0
        %v1734 = vadd.f32 0.0, %v1733
        %v1735 = vpop.f32.mrb[0].mxu0
        %v1736 = vadd.f32 0.0, %v1735
        %v1737 = vpop.f32.mrb[0].mxu0
        %v1738 = vpop.f32.mrb[0].mxu0
        %1739 = vdwg.mxu0
        %v1740 = vadd.f32 %v1498, %v1734
        %v1741 = vadd.f32 %v1500, %v1736
        %v1742 = vld [vmem:[%s4] sm:$0x3]
        %v1744 = vlaneseq
        %v1745 = vshrl.u32 %v1744, 7
        %v1746 = vsub.s32 0, %v1745
        %v1747 = vrot.slane %v1742, %v1746
        %v1748 = vlaneseq
        %v1749 = vshrl.u32 %v1748, 7
        %v1750 = vsub.s32 1, %v1749
        %v1751 = vrot.slane %v1742, %v1750
        %v1754 = vadd.f32 %v1740, %v1747
        %v1755 = vadd.f32 %v1741, %v1751
        %v1756 = vadd.f32 %v1754, %v270
        %v1757 = vadd.f32 %v1755, %v271
        %1758 = vst [vmem:[%s269] sm:$0xff] %v1756
        %1759 = vst [vmem:[%s269 + $0x8] sm:$0xff] %v1757
        %s1760 = sand.u32 %s141, 1
        %s1761 = scalar_lea.sflag [#allocation4], %s1760
        %s1762 = sand.u32 %s141, 1
        %s1763 = smul.addr %s1762, 16
        %s1764 = scalar_lea.vmem [#allocation8], %s1763
        // Predicated region
        $region53: #{tpu_custom_call.1} parent=39 // pred_check
          %p1765 = pneg %p151
        $region54: #{tpu_custom_call.1} parent=39 // pred_check_branch
          %1767 = sbr.rel (%p1765) target = $region56
        $region55: #{tpu_custom_call.1} parent=39 // pred_region
          %s1769 = ssub.s32 256, 256
          %1770 = vsyncadd %s1761, %s1769
          %s1771 = smul.addr %s23, 2
          %s1772 = smul.addr %s1771, 128
          %s1773 = scalar_lea.hbm %s5, %s1772
          %s1775 = sshll.u32 %s1764, 4
          %s1776 = int_to_ptr.vmem [resolvable:$true] %s1775
          %1778 = dma.vmem_to_hbm [thread:$0]  %s1776, 256, %s1773, %s1761
        $region56: #{tpu_custom_call.1} parent=39 // pred_fallthru
          _
      $region40: #{tpu_custom_call.1} parent=5 // pred_fallthru
        _
      %p1779 = scmp.le.s32.totalorder 2, %s18
      // Predicated region
      $region57: #{tpu_custom_call.1} parent=5 // pred_check
        %p1780 = pneg %p1779
      $region58: #{tpu_custom_call.1} parent=5 // pred_check_branch
        %1782 = sbr.rel (%p1780) target = $region60
      $region59: #{tpu_custom_call.1} parent=5 // pred_region
        %s1783 = ssub.s32 %s18, 2
        // Predicated region
        $region61: #{tpu_custom_call.1} parent=59 // pred_check
          %p1784 = pneg %p157
        $region62: #{tpu_custom_call.1} parent=59 // pred_check_branch
          %1786 = sbr.rel (%p1784) target = $region64
        $region63: #{tpu_custom_call.1} parent=59 // pred_region
          %s1787 = sand.u32 %s142, 1
          %s1788 = scalar_lea.sflag [#allocation4], %s1787
          %s1789 = sand.u32 %s142, 1
          %s1790 = smul.addr %s1789, 16
          %s1791 = scalar_lea.vmem [#allocation8], %s1790
          %1792 = dma.done %s1788, 256
        $region64: #{tpu_custom_call.1} parent=59 // pred_fallthru
          _
      $region60: #{tpu_custom_call.1} parent=5 // pred_fallthru
        _
    $region6: #{tpu_custom_call.1} parent=1 // loop_footer
      %s22 = sadd.s32 1, %s18
    $region7: #{tpu_custom_call.1} parent=1 // loop_footer_branch
      %17 = sbr.rel target = $region3
    $region8: #{tpu_custom_call.1} parent=1 // loop_exit
      _
    %1793 = vsyncpa [#allocation3], 1
    %s1794 = scalar_lea.sflag [#allocation3], 1
    %1795 = vsyncpa %s1794, 1
    %1796 = vsyncpa [#allocation6], 1
    %1797 = vsyncpa [#allocation4], 1
    %s1798 = scalar_lea.sflag [#allocation4], 1
    %1799 = vsyncpa %s1798, 1

</llo_original>
